<compile_context>
chip_gen: v7x
topology: tpu7x:2x2x1
jax: 0.10.0
libtpu: 0.0.40
codegen_flags: <defaults>
</compile_context>

<pallas_src>
import functools

import jax
import jax.numpy as jnp
import numpy as np
from jax import lax
from jax.experimental import pallas as pl
from jax.experimental.pallas import tpu as pltpu


def _round_up(x, m):
    return (x + m - 1) // m * m


def _largest_divisor_leq(n, cap):
    cap = max(1, min(n, cap))
    for d in range(cap, 0, -1):
        if n % d == 0:
            return d
    return 1


def _vmem_limit_bytes():
    cap = None
    try:
        cap = pltpu.get_tpu_info().vmem_capacity_bytes
    except Exception:
        cap = None
    if not cap:
        cap = 64 * 1024 * 1024  # conservative default (v7x per-TC VMEM)
    # leave ~25% headroom for compiler-internal scratch, cap at 96 MiB
    return int(max(32 * 1024 * 1024, min(96 * 1024 * 1024, (cap * 3) // 4)))


# ---------------------------------------------------------------------------
# Kernel 1: conv3x3 (no bias; bias is absorbed by training-mode BN) as 3
# row-shifted matmuls with K = 3*Cin, plus per-grid-step partial BN statistics
# [sum ; centered sum of squares].  Output rows are stored as bfloat16.
# ---------------------------------------------------------------------------
def conv_stats_kernel(x_ref, w_ref, o_ref, ps_ref, *, rows, wcols):
    # x_ref : ((H+2)*W, 3*Cin) bf16  -- one padded image, (h, w)-major rows
    # w_ref : (3, 3*Cin, CoutP) bf16 -- weights grouped by dh
    # o_ref : (rows, CoutP) bf16     -- conv output rows for this tile
    # ps_ref: (2, CoutP) f32         -- partial [sum ; centered sum of squares]
    i = pl.program_id(1)
    base = i * rows                                  # multiple of W (W % 16 == 0)
    y = jnp.dot(x_ref[pl.ds(pl.multiple_of(base, 8), rows), :], w_ref[0],
                preferred_element_type=jnp.float32)
    y += jnp.dot(x_ref[pl.ds(pl.multiple_of(base + wcols, 8), rows), :], w_ref[1],
                 preferred_element_type=jnp.float32)
    y += jnp.dot(x_ref[pl.ds(pl.multiple_of(base + 2 * wcols, 8), rows), :], w_ref[2],
                 preferred_element_type=jnp.float32)
    o_ref[...] = y.astype(o_ref.dtype)
    s = jnp.sum(y, axis=0, keepdims=True)            # (1, CoutP) f32
    d = y - s * (1.0 / rows)                         # center with the tile mean
    ps_ref[0:1, :] = s
    ps_ref[1:2, :] = jnp.sum(d * d, axis=0, keepdims=True)


# ---------------------------------------------------------------------------
# Kernel 2: BN affine (scale/shift precomputed in the wrapper) + ReLU + 2x2
# average pool.  Each group of 2*W consecutive conv rows (= 2 image rows) is
# pooled with one small (W/2, 2W) matmul on bf16 operands (f32 accumulate).
# ---------------------------------------------------------------------------
def bn_relu_pool_kernel(x_ref, p_ref, sc_ref, sh_ref, o_ref, *, tb, rin, rout):
    # x_ref : (tb*rin, CoutP) bf16   p_ref: (rout, rin) bf16
    # sc/sh : (1, CoutP) f32         o_ref: (tb*rout, CoutP) f32
    y = jnp.maximum(x_ref[...].astype(jnp.float32) * sc_ref[...] + sh_ref[...], 0.0)
    yb = y.astype(jnp.bfloat16)
    p = p_ref[...]
    # TODO(synk): could replace the tb tiny pool matmuls with strided sublane adds
    # (ref[pl.ds(..., stride=2)]) to free the MXU entirely.
    for t in range(tb):                               # static unroll
        o_ref[t * rout:(t + 1) * rout, :] = jnp.dot(
            p, yb[t * rin:(t + 1) * rin, :], preferred_element_type=jnp.float32)


# ---------------------------------------------------------------------------
# Wrapper
# ---------------------------------------------------------------------------
def downblock2d_forward(x, w, b, gamma, beta, eps=1e-5):
    N, Cin, H, W = x.shape
    Cout = w.shape[0]
    assert w.shape == (Cout, Cin, 3, 3), "kernel_size=3, groups=1 only"
    # TODO(synk): support W not a multiple of 16 / odd H by padding W, and tile the
    # kernel-1 x block along H with a 2-row halo (manual DMA) for very large
    # H*W*Cin on v7x's 64 MiB/TC VMEM.
    assert H % 2 == 0 and W % 16 == 0, "demo kernel assumes even H and W % 16 == 0"
    del b  # conv bias before training-mode BN is absorbed by the mean subtraction
    Hp, Wp = H // 2, W // 2
    CoutP = _round_up(Cout, 128)                       # lane-dense output channels
    K3 = 3 * Cin
    vmem_limit = _vmem_limit_bytes()

    # --- glue: NCHW -> NHWC, zero pad, 3x W-shift concat (instead of 9x im2col) ---
    # TODO(synk): for large Cin (>=128) stream the plain padded image (K=Cin) and
    # take the dw shifts in-kernel (9 accumulating matmuls) to avoid this 3x copy.
    x_nhwc = jnp.transpose(x, (0, 2, 3, 1)).astype(jnp.bfloat16)
    xp = jnp.pad(x_nhwc, ((0, 0), (1, 1), (1, 1), (0, 0)))
    xcat = jnp.concatenate([xp[:, :, dw:dw + W, :] for dw in range(3)], axis=-1)
    xrows = xcat.reshape(N, (H + 2) * W, K3)           # (h, w)-major rows per image

    # weights grouped by dh: Wd[dh, dw*Cin+ci, co] = w[co, ci, dh, dw]
    wd = jnp.transpose(w, (2, 3, 1, 0)).reshape(3, K3, Cout)
    wd = jnp.pad(wd, ((0, 0), (0, 0), (0, CoutP - Cout))).astype(jnp.bfloat16)

    # --- kernel 1 tile selection (budget against real VMEM, even grid extent) ---
    budget1 = vmem_limit // 2
    fixed1 = 2 * ((H + 2) * W * K3 * 2) + 2 * (3 * K3 * CoutP * 2) + 8 * CoutP * 4
    per_row1 = 2 * CoutP * 2 + 12 * CoutP              # o double-buffered bf16 + f32 temps
    cap_rows = max(W, (budget1 - fixed1) // per_row1)
    TH = _largest_divisor_leq(H, max(1, cap_rows // W))
    if (N * (H // TH)) % 2 != 0:                       # prefer even extent for megacore
        for d in range(TH - 1, 0, -1):
            if H % d == 0 and (N * (H // d)) % 2 == 0:
                TH = d
                break
    rows = TH * W                                      # conv-output rows per tile
    n_hb = H // TH
    G1 = N * n_hb

    conv_rows, partial = pl.pallas_call(
        functools.partial(conv_stats_kernel, rows=rows, wcols=W),
        out_shape=(jax.ShapeDtypeStruct((N * H * W, CoutP), jnp.bfloat16),
                   jax.ShapeDtypeStruct((G1, 2, CoutP), jnp.float32)),
        grid_spec=pltpu.PrefetchScalarGridSpec(
            num_scalar_prefetch=0,
            grid=(N, n_hb),
            in_specs=[
                pl.BlockSpec((None, (H + 2) * W, K3), lambda n, i: (n, 0, 0)),
                pl.BlockSpec((3, K3, CoutP), lambda n, i: (0, 0, 0)),
            ],
            out_specs=[
                pl.BlockSpec((rows, CoutP), lambda n, i: (n * n_hb + i, 0)),
                pl.BlockSpec((None, 2, CoutP), lambda n, i: (n * n_hb + i, 0, 0)),
            ],
        ),
        compiler_params=pltpu.CompilerParams(
            dimension_semantics=("parallel", "parallel"),
            vmem_limit_bytes=vmem_limit),
    )(xrows, wd)

    # --- BN statistics reduction (Chan combine of centered per-tile sums) + affine ---
    count = float(N * H * W)
    sums = partial[:, 0, :]                            # (G1, CoutP)
    ssqs = partial[:, 1, :]                            # centered per-tile sum of squares
    mean = jnp.sum(sums, axis=0) / count
    tile_means = sums * (1.0 / rows)
    m2 = jnp.sum(ssqs, axis=0) + rows * jnp.sum((tile_means - mean[None, :]) ** 2, axis=0)
    var = jnp.maximum(m2 / count, 0.0)                 # biased variance (BN training)
    inv = lax.rsqrt(var + eps)
    gamma_p = jnp.pad(gamma, (0, CoutP - Cout))
    beta_p = jnp.pad(beta, (0, CoutP - Cout))
    scale = (gamma_p * inv).reshape(1, CoutP).astype(jnp.float32)
    shift = (beta_p - mean * gamma_p * inv).reshape(1, CoutP).astype(jnp.float32)

    # --- kernel 2: BN + ReLU + 2x2 average pool ---
    rin, rout = 2 * W, Wp
    pmat = np.zeros((rout, rin), np.float32)
    for wp in range(rout):
        for a in range(2):
            pmat[wp, a * W + 2 * wp] = 0.25
            pmat[wp, a * W + 2 * wp + 1] = 0.25
    pmat = jnp.asarray(pmat, dtype=jnp.bfloat16)       # 0.25 is exact in bf16

    NHp = N * Hp                                       # number of 2W-row chunks
    budget2 = vmem_limit // 2
    per_chunk = 14 * rin * CoutP                       # x/o double buffers + f32/bf16 temps
    TB = _largest_divisor_leq(NHp, min(64, max(1, budget2 // per_chunk)))
    grid2 = NHp // TB

    pooled = pl.pallas_call(
        functools.partial(bn_relu_pool_kernel, tb=TB, rin=rin, rout=rout),
        out_shape=jax.ShapeDtypeStruct((NHp * Wp, CoutP), jnp.float32),
        grid_spec=pltpu.PrefetchScalarGridSpec(
            num_scalar_prefetch=0,
            grid=(grid2,),
            in_specs=[
                pl.BlockSpec((TB * rin, CoutP), lambda i: (i, 0)),
                pl.BlockSpec((rout, rin), lambda i: (0, 0)),
                pl.BlockSpec((1, CoutP), lambda i: (0, 0)),
                pl.BlockSpec((1, CoutP), lambda i: (0, 0)),
            ],
            out_specs=pl.BlockSpec((TB * rout, CoutP), lambda i: (i, 0)),
        ),
        compiler_params=pltpu.CompilerParams(
            dimension_semantics=("parallel",),
            vmem_limit_bytes=vmem_limit),
    )(conv_rows, pmat, scale, shift)

    out_nhwc = pooled.reshape(N, Hp, Wp, CoutP)[:, :, :, :Cout]
    # TODO(synk): BN running_mean/running_var momentum updates are module
    # side-effects (training buffers), not part of the forward output; not emitted.
    return jnp.transpose(out_nhwc, (0, 3, 1, 2))


# ---------------------------------------------------------------------------
# Pure-JAX reference (mirrors PyTorch DownBlock2d.forward in training mode)
# ---------------------------------------------------------------------------
def reference_forward(x, w, b, gamma, beta, eps=1e-5):
    conv = lax.conv_general_dilated(
        x, w, window_strides=(1, 1), padding=((1, 1), (1, 1)),
        dimension_numbers=("NCHW", "OIHW", "NCHW"),
    ) + b[None, :, None, None]
    mean = conv.mean(axis=(0, 2, 3), keepdims=True)
    var = jnp.var(conv, axis=(0, 2, 3), keepdims=True)      # biased (BN training)
    y = (conv - mean) * lax.rsqrt(var + eps)
    y = y * gamma[None, :, None, None] + beta[None, :, None, None]
    y = jnp.maximum(y, 0.0)
    N, C, H, W = y.shape
    return y.reshape(N, C, H // 2, 2, W // 2, 2).mean(axis=(3, 5))


if __name__ == "__main__":
    N, Cin, Cout, H, W = 2, 4, 8, 16, 16
    key = jax.random.PRNGKey(0)
    kw, kb, kg, kbe, kx = jax.random.split(key, 5)

    w = 0.1 * jax.random.normal(kw, (Cout, Cin, 3, 3), jnp.float32)
    b = 0.1 * jax.random.normal(kb, (Cout,), jnp.float32)
    gamma = 1.0 + 0.1 * jax.random.normal(kg, (Cout,), jnp.float32)
    beta = 0.1 * jax.random.normal(kbe, (Cout,), jnp.float32)
    x = jax.random.normal(kx, (N, Cin, H, W), jnp.float32)

    fwd = jax.jit(downblock2d_forward)
    out = jax.block_until_ready(fwd(x, w, b, gamma, beta))

    ref = jax.block_until_ready(reference_forward(x, w, b, gamma, beta))
    assert out.shape == (N, Cout, H // 2, W // 2), out.shape
    # Tolerance reflects bf16 MXU operands + bf16 conv intermediate (f32 stats/accum).
    np.testing.assert_allclose(np.asarray(out), np.asarray(ref), rtol=2e-2, atol=2e-2)

    print("KERNEL_OK")
</pallas_src>

<mosaic_0001>
module attributes {stable_mosaic.version = 11 : i64} {
  func.func @conv_stats_kernel(%arg0: i32, %arg1: i32, %arg2: memref<1x288x12xbf16, #tpu.memory_space<vmem>>, %arg3: memref<3x12x128xbf16, #tpu.memory_space<vmem>>, %arg4: memref<256x128xbf16, #tpu.memory_space<vmem>>, %arg5: memref<1x2x128xf32, #tpu.memory_space<vmem>>) attributes {dimension_semantics = [#tpu.dimension_semantics<parallel>, #tpu.dimension_semantics<parallel>], iteration_bounds = array<i64: 2, 1>, scalar_prefetch = 0 : i64, scratch_operands = 0 : i64, tpu.core_type = #tpu.core_type<tc>, window_params = [{transform_indices = @transform_0, window_bounds = array<i64: 1, 288, 12>}, {pipeline_mode = #tpu.pipeline_mode<synchronous>, transform_indices = @transform_1, window_bounds = array<i64: 3, 12, 128>}, {transform_indices = @transform_2, window_bounds = array<i64: 256, 128>}, {transform_indices = @transform_3, window_bounds = array<i64: 1, 2, 128>}]} {
    %c256_i32 = arith.constant 256 : i32
    %0 = arith.muli %arg1, %c256_i32 : i32
    %1 = tpu.assume_multiple %0, 8 : i32
    %c0 = arith.constant 0 : index
    %2 = arith.index_cast %1 : i32 to index
    %c0_0 = arith.constant 0 : index
    %3 = vector.load %arg2[%c0, %2, %c0_0] : memref<1x288x12xbf16, #tpu.memory_space<vmem>>, vector<1x256x12xbf16>
    %4 = vector.shape_cast %3 : vector<1x256x12xbf16> to vector<256x12xbf16>
    %c0_1 = arith.constant 0 : index
    %c0_2 = arith.constant 0 : index
    %c0_3 = arith.constant 0 : index
    %5 = vector.load %arg3[%c0_1, %c0_2, %c0_3] : memref<3x12x128xbf16, #tpu.memory_space<vmem>>, vector<1x12x128xbf16>
    %6 = vector.shape_cast %5 : vector<1x12x128xbf16> to vector<12x128xbf16>
    %cst = arith.constant dense<0.000000e+00> : vector<256x128xf32>
    %7 = tpu.matmul %4, %6, %cst {dimension_numbers = #tpu.dot_dimension_numbers<[1], [0], [0], [1], [0, 0, 1, 1], [], []>} : vector<256x12xbf16>, vector<12x128xbf16>, vector<256x128xf32> -> vector<256x128xf32>
    %c16_i32 = arith.constant 16 : i32
    %8 = arith.addi %0, %c16_i32 : i32
    %9 = tpu.assume_multiple %8, 8 : i32
    %c0_4 = arith.constant 0 : index
    %10 = arith.index_cast %9 : i32 to index
    %c0_5 = arith.constant 0 : index
    %11 = vector.load %arg2[%c0_4, %10, %c0_5] : memref<1x288x12xbf16, #tpu.memory_space<vmem>>, vector<1x256x12xbf16>
    %12 = vector.shape_cast %11 : vector<1x256x12xbf16> to vector<256x12xbf16>
    %c1 = arith.constant 1 : index
    %c0_6 = arith.constant 0 : index
    %c0_7 = arith.constant 0 : index
    %13 = vector.load %arg3[%c1, %c0_6, %c0_7] : memref<3x12x128xbf16, #tpu.memory_space<vmem>>, vector<1x12x128xbf16>
    %14 = vector.shape_cast %13 : vector<1x12x128xbf16> to vector<12x128xbf16>
    %cst_8 = arith.constant dense<0.000000e+00> : vector<256x128xf32>
    %15 = tpu.matmul %12, %14, %cst_8 {dimension_numbers = #tpu.dot_dimension_numbers<[1], [0], [0], [1], [0, 0, 1, 1], [], []>} : vector<256x12xbf16>, vector<12x128xbf16>, vector<256x128xf32> -> vector<256x128xf32>
    %16 = arith.addf %7, %15 : vector<256x128xf32>
    %c32_i32 = arith.constant 32 : i32
    %17 = arith.addi %0, %c32_i32 : i32
    %18 = tpu.assume_multiple %17, 8 : i32
    %c0_9 = arith.constant 0 : index
    %19 = arith.index_cast %18 : i32 to index
    %c0_10 = arith.constant 0 : index
    %20 = vector.load %arg2[%c0_9, %19, %c0_10] : memref<1x288x12xbf16, #tpu.memory_space<vmem>>, vector<1x256x12xbf16>
    %21 = vector.shape_cast %20 : vector<1x256x12xbf16> to vector<256x12xbf16>
    %c2 = arith.constant 2 : index
    %c0_11 = arith.constant 0 : index
    %c0_12 = arith.constant 0 : index
    %22 = vector.load %arg3[%c2, %c0_11, %c0_12] : memref<3x12x128xbf16, #tpu.memory_space<vmem>>, vector<1x12x128xbf16>
    %23 = vector.shape_cast %22 : vector<1x12x128xbf16> to vector<12x128xbf16>
    %cst_13 = arith.constant dense<0.000000e+00> : vector<256x128xf32>
    %24 = tpu.matmul %21, %23, %cst_13 {dimension_numbers = #tpu.dot_dimension_numbers<[1], [0], [0], [1], [0, 0, 1, 1], [], []>} : vector<256x12xbf16>, vector<12x128xbf16>, vector<256x128xf32> -> vector<256x128xf32>
    %25 = arith.addf %16, %24 : vector<256x128xf32>
    %26 = arith.truncf %25 : vector<256x128xf32> to vector<256x128xbf16>
    %c0_14 = arith.constant 0 : index
    %c0_15 = arith.constant 0 : index
    %27 = vector.load %arg4[%c0_14, %c0_15] : memref<256x128xbf16, #tpu.memory_space<vmem>>, vector<256x128xbf16>
    tpu.vector_store %arg4[%c0_14, %c0_15], %26 {strides = array<i32>} : memref<256x128xbf16, #tpu.memory_space<vmem>>, vector<256x128xbf16>,
    %cst_16 = arith.constant dense<0.000000e+00> : vector<128xf32>
    %28 = vector.multi_reduction <add>, %25, %cst_16 [0] : vector<256x128xf32> to vector<128xf32>
    %29 = vector.shape_cast %28 : vector<128xf32> to vector<1x128xf32>
    %cst_17 = arith.constant 3.906250e-03 : f32
    %30 = vector.broadcast %cst_17 : f32 to vector<1x128xf32>
    %31 = arith.mulf %29, %30 : vector<1x128xf32>
    %32 = vector.broadcast %31 : vector<1x128xf32> to vector<256x128xf32>
    %33 = arith.subf %25, %32 : vector<256x128xf32>
    %c0_18 = arith.constant 0 : index
    %c0_19 = arith.constant 0 : index
    %c0_20 = arith.constant 0 : index
    %34 = vector.load %arg5[%c0_18, %c0_19, %c0_20] : memref<1x2x128xf32, #tpu.memory_space<vmem>>, vector<1x1x128xf32>
    %35 = vector.shape_cast %34 : vector<1x1x128xf32> to vector<1x128xf32>
    %36 = vector.shape_cast %29 : vector<1x128xf32> to vector<1x1x128xf32>
    tpu.vector_store %arg5[%c0_18, %c0_19, %c0_20], %36 {strides = array<i32>} : memref<1x2x128xf32, #tpu.memory_space<vmem>>, vector<1x1x128xf32>,
    %37 = arith.mulf %33, %33 : vector<256x128xf32>
    %cst_21 = arith.constant dense<0.000000e+00> : vector<128xf32>
    %38 = vector.multi_reduction <add>, %37, %cst_21 [0] : vector<256x128xf32> to vector<128xf32>
    %39 = vector.shape_cast %38 : vector<128xf32> to vector<1x128xf32>
    %c0_22 = arith.constant 0 : index
    %c1_23 = arith.constant 1 : index
    %c0_24 = arith.constant 0 : index
    %40 = vector.load %arg5[%c0_22, %c1_23, %c0_24] : memref<1x2x128xf32, #tpu.memory_space<vmem>>, vector<1x1x128xf32>
    %41 = vector.shape_cast %40 : vector<1x1x128xf32> to vector<1x128xf32>
    %42 = vector.shape_cast %39 : vector<1x128xf32> to vector<1x1x128xf32>
    tpu.vector_store %arg5[%c0_22, %c1_23, %c0_24], %42 {strides = array<i32>} : memref<1x2x128xf32, #tpu.memory_space<vmem>>, vector<1x1x128xf32>,
    return
  }
  func.func @transform_0(%arg0: i32, %arg1: i32) -> (i32, i32, i32) {
    %c0_i32 = arith.constant 0 : i32
    %c0_i32_0 = arith.constant 0 : i32
    %c0_i32_1 = arith.constant 0 : i32
    return %arg0, %c0_i32, %c0_i32_0 : i32, i32, i32
  }
  func.func @transform_1(%arg0: i32, %arg1: i32) -> (i32, i32, i32) {
    %c0_i32 = arith.constant 0 : i32
    %c0_i32_0 = arith.constant 0 : i32
    %c0_i32_1 = arith.constant 0 : i32
    %c0_i32_2 = arith.constant 0 : i32
    return %c0_i32, %c0_i32_0, %c0_i32_1 : i32, i32, i32
  }
  func.func @transform_2(%arg0: i32, %arg1: i32) -> (i32, i32) {
    %c1_i32 = arith.constant 1 : i32
    %0 = arith.muli %arg0, %c1_i32 : i32
    %1 = arith.addi %0, %arg1 : i32
    %c0_i32 = arith.constant 0 : i32
    %c0_i32_0 = arith.constant 0 : i32
    return %1, %c0_i32 : i32, i32
  }
  func.func @transform_3(%arg0: i32, %arg1: i32) -> (i32, i32, i32) {
    %c1_i32 = arith.constant 1 : i32
    %0 = arith.muli %arg0, %c1_i32 : i32
    %1 = arith.addi %0, %arg1 : i32
    %c0_i32 = arith.constant 0 : i32
    %c0_i32_0 = arith.constant 0 : i32
    %c0_i32_1 = arith.constant 0 : i32
    return %1, %c0_i32, %c0_i32_0 : i32, i32, i32
  }
}

module attributes {stable_mosaic.version = 11 : i64} {
  func.func @bn_relu_pool_kernel(%arg0: i32, %arg1: memref<512x128xbf16, #tpu.memory_space<vmem>>, %arg2: memref<8x32xbf16, #tpu.memory_space<vmem>>, %arg3: memref<1x128xf32, #tpu.memory_space<vmem>>, %arg4: memref<1x128xf32, #tpu.memory_space<vmem>>, %arg5: memref<128x128xf32, #tpu.memory_space<vmem>>) attributes {dimension_semantics = [#tpu.dimension_semantics<parallel>], iteration_bounds = array<i64: 1>, scalar_prefetch = 0 : i64, scratch_operands = 0 : i64, tpu.core_type = #tpu.core_type<tc>, window_params = [{transform_indices = @transform_0, window_bounds = array<i64: 512, 128>}, {pipeline_mode = #tpu.pipeline_mode<synchronous>, transform_indices = @transform_1, window_bounds = array<i64: 8, 32>}, {pipeline_mode = #tpu.pipeline_mode<synchronous>, transform_indices = @transform_2, window_bounds = array<i64: 1, 128>}, {pipeline_mode = #tpu.pipeline_mode<synchronous>, transform_indices = @transform_3, window_bounds = array<i64: 1, 128>}, {transform_indices = @transform_4, window_bounds = array<i64: 128, 128>}]} {
    %c0 = arith.constant 0 : index
    %c0_0 = arith.constant 0 : index
    %0 = vector.load %arg1[%c0, %c0_0] : memref<512x128xbf16, #tpu.memory_space<vmem>>, vector<512x128xbf16>
    %1 = arith.extf %0 : vector<512x128xbf16> to vector<512x128xf32>
    %c0_1 = arith.constant 0 : index
    %c0_2 = arith.constant 0 : index
    %2 = vector.load %arg3[%c0_1, %c0_2] : memref<1x128xf32, #tpu.memory_space<vmem>>, vector<1x128xf32>
    %3 = vector.broadcast %2 : vector<1x128xf32> to vector<512x128xf32>
    %4 = arith.mulf %1, %3 : vector<512x128xf32>
    %c0_3 = arith.constant 0 : index
    %c0_4 = arith.constant 0 : index
    %5 = vector.load %arg4[%c0_3, %c0_4] : memref<1x128xf32, #tpu.memory_space<vmem>>, vector<1x128xf32>
    %6 = vector.broadcast %5 : vector<1x128xf32> to vector<512x128xf32>
    %7 = arith.addf %4, %6 : vector<512x128xf32>
    %cst = arith.constant 0.000000e+00 : f32
    %8 = vector.broadcast %cst : f32 to vector<512x128xf32>
    %9 = arith.maximumf %7, %8 : vector<512x128xf32>
    %10 = arith.truncf %9 : vector<512x128xf32> to vector<512x128xbf16>
    %c0_5 = arith.constant 0 : index
    %c0_6 = arith.constant 0 : index
    %11 = vector.load %arg2[%c0_5, %c0_6] : memref<8x32xbf16, #tpu.memory_space<vmem>>, vector<8x32xbf16>
    %12 = vector.extract_strided_slice %10 {offsets = [0, 0], sizes = [32, 128], strides = [1, 1]} : vector<512x128xbf16> to vector<32x128xbf16>
    %cst_7 = arith.constant dense<0.000000e+00> : vector<8x128xf32>
    %13 = tpu.matmul %11, %12, %cst_7 {dimension_numbers = #tpu.dot_dimension_numbers<[1], [0], [0], [1], [0, 0, 1, 1], [], []>} : vector<8x32xbf16>, vector<32x128xbf16>, vector<8x128xf32> -> vector<8x128xf32>
    %c0_8 = arith.constant 0 : index
    %c0_9 = arith.constant 0 : index
    %14 = vector.load %arg5[%c0_8, %c0_9] : memref<128x128xf32, #tpu.memory_space<vmem>>, vector<8x128xf32>
    tpu.vector_store %arg5[%c0_8, %c0_9], %13 {strides = array<i32>} : memref<128x128xf32, #tpu.memory_space<vmem>>, vector<8x128xf32>,
    %15 = vector.extract_strided_slice %10 {offsets = [32, 0], sizes = [32, 128], strides = [1, 1]} : vector<512x128xbf16> to vector<32x128xbf16>
    %cst_10 = arith.constant dense<0.000000e+00> : vector<8x128xf32>
    %16 = tpu.matmul %11, %15, %cst_10 {dimension_numbers = #tpu.dot_dimension_numbers<[1], [0], [0], [1], [0, 0, 1, 1], [], []>} : vector<8x32xbf16>, vector<32x128xbf16>, vector<8x128xf32> -> vector<8x128xf32>
    %c8 = arith.constant 8 : index
    %c0_11 = arith.constant 0 : index
    %17 = vector.load %arg5[%c8, %c0_11] : memref<128x128xf32, #tpu.memory_space<vmem>>, vector<8x128xf32>
    tpu.vector_store %arg5[%c8, %c0_11], %16 {strides = array<i32>} : memref<128x128xf32, #tpu.memory_space<vmem>>, vector<8x128xf32>,
    %18 = vector.extract_strided_slice %10 {offsets = [64, 0], sizes = [32, 128], strides = [1, 1]} : vector<512x128xbf16> to vector<32x128xbf16>
    %cst_12 = arith.constant dense<0.000000e+00> : vector<8x128xf32>
    %19 = tpu.matmul %11, %18, %cst_12 {dimension_numbers = #tpu.dot_dimension_numbers<[1], [0], [0], [1], [0, 0, 1, 1], [], []>} : vector<8x32xbf16>, vector<32x128xbf16>, vector<8x128xf32> -> vector<8x128xf32>
    %c16 = arith.constant 16 : index
    %c0_13 = arith.constant 0 : index
    %20 = vector.load %arg5[%c16, %c0_13] : memref<128x128xf32, #tpu.memory_space<vmem>>, vector<8x128xf32>
    tpu.vector_store %arg5[%c16, %c0_13], %19 {strides = array<i32>} : memref<128x128xf32, #tpu.memory_space<vmem>>, vector<8x128xf32>,
    %21 = vector.extract_strided_slice %10 {offsets = [96, 0], sizes = [32, 128], strides = [1, 1]} : vector<512x128xbf16> to vector<32x128xbf16>
    %cst_14 = arith.constant dense<0.000000e+00> : vector<8x128xf32>
    %22 = tpu.matmul %11, %21, %cst_14 {dimension_numbers = #tpu.dot_dimension_numbers<[1], [0], [0], [1], [0, 0, 1, 1], [], []>} : vector<8x32xbf16>, vector<32x128xbf16>, vector<8x128xf32> -> vector<8x128xf32>
    %c24 = arith.constant 24 : index
    %c0_15 = arith.constant 0 : index
    %23 = vector.load %arg5[%c24, %c0_15] : memref<128x128xf32, #tpu.memory_space<vmem>>, vector<8x128xf32>
    tpu.vector_store %arg5[%c24, %c0_15], %22 {strides = array<i32>} : memref<128x128xf32, #tpu.memory_space<vmem>>, vector<8x128xf32>,
    %24 = vector.extract_strided_slice %10 {offsets = [128, 0], sizes = [32, 128], strides = [1, 1]} : vector<512x128xbf16> to vector<32x128xbf16>
    %cst_16 = arith.constant dense<0.000000e+00> : vector<8x128xf32>
    %25 = tpu.matmul %11, %24, %cst_16 {dimension_numbers = #tpu.dot_dimension_numbers<[1], [0], [0], [1], [0, 0, 1, 1], [], []>} : vector<8x32xbf16>, vector<32x128xbf16>, vector<8x128xf32> -> vector<8x128xf32>
    %c32 = arith.constant 32 : index
    %c0_17 = arith.constant 0 : index
    %26 = vector.load %arg5[%c32, %c0_17] : memref<128x128xf32, #tpu.memory_space<vmem>>, vector<8x128xf32>
    tpu.vector_store %arg5[%c32, %c0_17], %25 {strides = array<i32>} : memref<128x128xf32, #tpu.memory_space<vmem>>, vector<8x128xf32>,
    %27 = vector.extract_strided_slice %10 {offsets = [160, 0], sizes = [32, 128], strides = [1, 1]} : vector<512x128xbf16> to vector<32x128xbf16>
    %cst_18 = arith.constant dense<0.000000e+00> : vector<8x128xf32>
    %28 = tpu.matmul %11, %27, %cst_18 {dimension_numbers = #tpu.dot_dimension_numbers<[1], [0], [0], [1], [0, 0, 1, 1], [], []>} : vector<8x32xbf16>, vector<32x128xbf16>, vector<8x128xf32> -> vector<8x128xf32>
    %c40 = arith.constant 40 : index
    %c0_19 = arith.constant 0 : index
    %29 = vector.load %arg5[%c40, %c0_19] : memref<128x128xf32, #tpu.memory_space<vmem>>, vector<8x128xf32>
    tpu.vector_store %arg5[%c40, %c0_19], %28 {strides = array<i32>} : memref<128x128xf32, #tpu.memory_space<vmem>>, vector<8x128xf32>,
    %30 = vector.extract_strided_slice %10 {offsets = [192, 0], sizes = [32, 128], strides = [1, 1]} : vector<512x128xbf16> to vector<32x128xbf16>
    %cst_20 = arith.constant dense<0.000000e+00> : vector<8x128xf32>
    %31 = tpu.matmul %11, %30, %cst_20 {dimension_numbers = #tpu.dot_dimension_numbers<[1], [0], [0], [1], [0, 0, 1, 1], [], []>} : vector<8x32xbf16>, vector<32x128xbf16>, vector<8x128xf32> -> vector<8x128xf32>
    %c48 = arith.constant 48 : index
    %c0_21 = arith.constant 0 : index
    %32 = vector.load %arg5[%c48, %c0_21] : memref<128x128xf32, #tpu.memory_space<vmem>>, vector<8x128xf32>
    tpu.vector_store %arg5[%c48, %c0_21], %31 {strides = array<i32>} : memref<128x128xf32, #tpu.memory_space<vmem>>, vector<8x128xf32>,
    %33 = vector.extract_strided_slice %10 {offsets = [224, 0], sizes = [32, 128], strides = [1, 1]} : vector<512x128xbf16> to vector<32x128xbf16>
    %cst_22 = arith.constant dense<0.000000e+00> : vector<8x128xf32>
    %34 = tpu.matmul %11, %33, %cst_22 {dimension_numbers = #tpu.dot_dimension_numbers<[1], [0], [0], [1], [0, 0, 1, 1], [], []>} : vector<8x32xbf16>, vector<32x128xbf16>, vector<8x128xf32> -> vector<8x128xf32>
    %c56 = arith.constant 56 : index
    %c0_23 = arith.constant 0 : index
    %35 = vector.load %arg5[%c56, %c0_23] : memref<128x128xf32, #tpu.memory_space<vmem>>, vector<8x128xf32>
    tpu.vector_store %arg5[%c56, %c0_23], %34 {strides = array<i32>} : memref<128x128xf32, #tpu.memory_space<vmem>>, vector<8x128xf32>,
    %36 = vector.extract_strided_slice %10 {offsets = [256, 0], sizes = [32, 128], strides = [1, 1]} : vector<512x128xbf16> to vector<32x128xbf16>
    %cst_24 = arith.constant dense<0.000000e+00> : vector<8x128xf32>
    %37 = tpu.matmul %11, %36, %cst_24 {dimension_numbers = #tpu.dot_dimension_numbers<[1], [0], [0], [1], [0, 0, 1, 1], [], []>} : vector<8x32xbf16>, vector<32x128xbf16>, vector<8x128xf32> -> vector<8x128xf32>
    %c64 = arith.constant 64 : index
    %c0_25 = arith.constant 0 : index
    %38 = vector.load %arg5[%c64, %c0_25] : memref<128x128xf32, #tpu.memory_space<vmem>>, vector<8x128xf32>
    tpu.vector_store %arg5[%c64, %c0_25], %37 {strides = array<i32>} : memref<128x128xf32, #tpu.memory_space<vmem>>, vector<8x128xf32>,
    %39 = vector.extract_strided_slice %10 {offsets = [288, 0], sizes = [32, 128], strides = [1, 1]} : vector<512x128xbf16> to vector<32x128xbf16>
    %cst_26 = arith.constant dense<0.000000e+00> : vector<8x128xf32>
    %40 = tpu.matmul %11, %39, %cst_26 {dimension_numbers = #tpu.dot_dimension_numbers<[1], [0], [0], [1], [0, 0, 1, 1], [], []>} : vector<8x32xbf16>, vector<32x128xbf16>, vector<8x128xf32> -> vector<8x128xf32>
    %c72 = arith.constant 72 : index
    %c0_27 = arith.constant 0 : index
    %41 = vector.load %arg5[%c72, %c0_27] : memref<128x128xf32, #tpu.memory_space<vmem>>, vector<8x128xf32>
    tpu.vector_store %arg5[%c72, %c0_27], %40 {strides = array<i32>} : memref<128x128xf32, #tpu.memory_space<vmem>>, vector<8x128xf32>,
    %42 = vector.extract_strided_slice %10 {offsets = [320, 0], sizes = [32, 128], strides = [1, 1]} : vector<512x128xbf16> to vector<32x128xbf16>
    %cst_28 = arith.constant dense<0.000000e+00> : vector<8x128xf32>
    %43 = tpu.matmul %11, %42, %cst_28 {dimension_numbers = #tpu.dot_dimension_numbers<[1], [0], [0], [1], [0, 0, 1, 1], [], []>} : vector<8x32xbf16>, vector<32x128xbf16>, vector<8x128xf32> -> vector<8x128xf32>
    %c80 = arith.constant 80 : index
    %c0_29 = arith.constant 0 : index
    %44 = vector.load %arg5[%c80, %c0_29] : memref<128x128xf32, #tpu.memory_space<vmem>>, vector<8x128xf32>
    tpu.vector_store %arg5[%c80, %c0_29], %43 {strides = array<i32>} : memref<128x128xf32, #tpu.memory_space<vmem>>, vector<8x128xf32>,
    %45 = vector.extract_strided_slice %10 {offsets = [352, 0], sizes = [32, 128], strides = [1, 1]} : vector<512x128xbf16> to vector<32x128xbf16>
    %cst_30 = arith.constant dense<0.000000e+00> : vector<8x128xf32>
    %46 = tpu.matmul %11, %45, %cst_30 {dimension_numbers = #tpu.dot_dimension_numbers<[1], [0], [0], [1], [0, 0, 1, 1], [], []>} : vector<8x32xbf16>, vector<32x128xbf16>, vector<8x128xf32> -> vector<8x128xf32>
    %c88 = arith.constant 88 : index
    %c0_31 = arith.constant 0 : index
    %47 = vector.load %arg5[%c88, %c0_31] : memref<128x128xf32, #tpu.memory_space<vmem>>, vector<8x128xf32>
    tpu.vector_store %arg5[%c88, %c0_31], %46 {strides = array<i32>} : memref<128x128xf32, #tpu.memory_space<vmem>>, vector<8x128xf32>,
    %48 = vector.extract_strided_slice %10 {offsets = [384, 0], sizes = [32, 128], strides = [1, 1]} : vector<512x128xbf16> to vector<32x128xbf16>
    %cst_32 = arith.constant dense<0.000000e+00> : vector<8x128xf32>
    %49 = tpu.matmul %11, %48, %cst_32 {dimension_numbers = #tpu.dot_dimension_numbers<[1], [0], [0], [1], [0, 0, 1, 1], [], []>} : vector<8x32xbf16>, vector<32x128xbf16>, vector<8x128xf32> -> vector<8x128xf32>
    %c96 = arith.constant 96 : index
    %c0_33 = arith.constant 0 : index
    %50 = vector.load %arg5[%c96, %c0_33] : memref<128x128xf32, #tpu.memory_space<vmem>>, vector<8x128xf32>
    tpu.vector_store %arg5[%c96, %c0_33], %49 {strides = array<i32>} : memref<128x128xf32, #tpu.memory_space<vmem>>, vector<8x128xf32>,
    %51 = vector.extract_strided_slice %10 {offsets = [416, 0], sizes = [32, 128], strides = [1, 1]} : vector<512x128xbf16> to vector<32x128xbf16>
    %cst_34 = arith.constant dense<0.000000e+00> : vector<8x128xf32>
    %52 = tpu.matmul %11, %51, %cst_34 {dimension_numbers = #tpu.dot_dimension_numbers<[1], [0], [0], [1], [0, 0, 1, 1], [], []>} : vector<8x32xbf16>, vector<32x128xbf16>, vector<8x128xf32> -> vector<8x128xf32>
    %c104 = arith.constant 104 : index
    %c0_35 = arith.constant 0 : index
    %53 = vector.load %arg5[%c104, %c0_35] : memref<128x128xf32, #tpu.memory_space<vmem>>, vector<8x128xf32>
    tpu.vector_store %arg5[%c104, %c0_35], %52 {strides = array<i32>} : memref<128x128xf32, #tpu.memory_space<vmem>>, vector<8x128xf32>,
    %54 = vector.extract_strided_slice %10 {offsets = [448, 0], sizes = [32, 128], strides = [1, 1]} : vector<512x128xbf16> to vector<32x128xbf16>
    %cst_36 = arith.constant dense<0.000000e+00> : vector<8x128xf32>
    %55 = tpu.matmul %11, %54, %cst_36 {dimension_numbers = #tpu.dot_dimension_numbers<[1], [0], [0], [1], [0, 0, 1, 1], [], []>} : vector<8x32xbf16>, vector<32x128xbf16>, vector<8x128xf32> -> vector<8x128xf32>
    %c112 = arith.constant 112 : index
    %c0_37 = arith.constant 0 : index
    %56 = vector.load %arg5[%c112, %c0_37] : memref<128x128xf32, #tpu.memory_space<vmem>>, vector<8x128xf32>
    tpu.vector_store %arg5[%c112, %c0_37], %55 {strides = array<i32>} : memref<128x128xf32, #tpu.memory_space<vmem>>, vector<8x128xf32>,
    %57 = vector.extract_strided_slice %10 {offsets = [480, 0], sizes = [32, 128], strides = [1, 1]} : vector<512x128xbf16> to vector<32x128xbf16>
    %cst_38 = arith.constant dense<0.000000e+00> : vector<8x128xf32>
    %58 = tpu.matmul %11, %57, %cst_38 {dimension_numbers = #tpu.dot_dimension_numbers<[1], [0], [0], [1], [0, 0, 1, 1], [], []>} : vector<8x32xbf16>, vector<32x128xbf16>, vector<8x128xf32> -> vector<8x128xf32>
    %c120 = arith.constant 120 : index
    %c0_39 = arith.constant 0 : index
    %59 = vector.load %arg5[%c120, %c0_39] : memref<128x128xf32, #tpu.memory_space<vmem>>, vector<8x128xf32>
    tpu.vector_store %arg5[%c120, %c0_39], %58 {strides = array<i32>} : memref<128x128xf32, #tpu.memory_space<vmem>>, vector<8x128xf32>,
    return
  }
  func.func @transform_0(%arg0: i32) -> (i32, i32) {
    %c0_i32 = arith.constant 0 : i32
    %c0_i32_0 = arith.constant 0 : i32
    return %arg0, %c0_i32 : i32, i32
  }
  func.func @transform_1(%arg0: i32) -> (i32, i32) {
    %c0_i32 = arith.constant 0 : i32
    %c0_i32_0 = arith.constant 0 : i32
    %c0_i32_1 = arith.constant 0 : i32
    return %c0_i32, %c0_i32_0 : i32, i32
  }
  func.func @transform_2(%arg0: i32) -> (i32, i32) {
    %c0_i32 = arith.constant 0 : i32
    %c0_i32_0 = arith.constant 0 : i32
    %c0_i32_1 = arith.constant 0 : i32
    return %c0_i32, %c0_i32_0 : i32, i32
  }
  func.func @transform_3(%arg0: i32) -> (i32, i32) {
    %c0_i32 = arith.constant 0 : i32
    %c0_i32_0 = arith.constant 0 : i32
    %c0_i32_1 = arith.constant 0 : i32
    return %c0_i32, %c0_i32_0 : i32, i32
  }
  func.func @transform_4(%arg0: i32) -> (i32, i32) {
    %c0_i32 = arith.constant 0 : i32
    %c0_i32_0 = arith.constant 0 : i32
    return %arg0, %c0_i32 : i32, i32
  }
}

</mosaic_0001>

<llo_original>
// kernel: downblock2d_forward.3
$region0: #{downblock2d_forward.3}
  #allocation0 [shape = 'u32[]', space=smem, size = 0x4, offset = 0x4, fixed_abs, tag = 'smem constant byte address 0x4 - core index']
  #allocation1 [shape = 'u32[144,128]{1,0:T(1,128)}', space=vmem, size = 0x12000, scoped, tag = 'internal scratch']
  %s0 = inlined_call_operand.vmem [shape: bf16[512,128], index: 0, kind: input, shape index: {}]
  %s1 = inlined_call_operand.vmem [shape: bf16[8,32], index: 1, kind: input, shape index: {}]
  %s2 = inlined_call_operand.vmem [shape: f32[1,128], index: 2, kind: input, shape index: {}]
  %s3 = inlined_call_operand.vmem [shape: f32[1,128], index: 3, kind: input, shape index: {}]
  %s4 = inlined_call_operand.vmem [shape: f32[128,128], index: 4, kind: output, shape index: {}]
  %s5 = sld [smem:[#allocation0]]
  $region26: #{downblock2d_forward.3} parent=0
    _
  %s7 = ssub.s32 1, %s5
  %s8 = scalar_select 0, %s7, %s5
  // Predicated region
  $region2: #{downblock2d_forward.3} parent=0 // pred_check
    _
  $region3: #{downblock2d_forward.3} parent=0 // pred_check_branch
    %10 = sbr.rel (0) target = $region5
  $region4: #{downblock2d_forward.3} parent=0 // pred_region
    _
  $region5: #{downblock2d_forward.3} parent=0 // pred_fallthru
    _
  // Predicated region
  $region6: #{downblock2d_forward.3} parent=0 // pred_check
    _
  $region7: #{downblock2d_forward.3} parent=0 // pred_check_branch
    %12 = sbr.rel (0) target = $region9
  $region8: #{downblock2d_forward.3} parent=0 // pred_region
    _
  $region9: #{downblock2d_forward.3} parent=0 // pred_fallthru
    _
  // Predicated region
  $region10: #{downblock2d_forward.3} parent=0 // pred_check
    _
  $region11: #{downblock2d_forward.3} parent=0 // pred_check_branch
    %14 = sbr.rel (0) target = $region13
  $region12: #{downblock2d_forward.3} parent=0 // pred_region
    _
  $region13: #{downblock2d_forward.3} parent=0 // pred_fallthru
    _
  // Predicated region
  $region14: #{downblock2d_forward.3} parent=0 // pred_check
    _
  $region15: #{downblock2d_forward.3} parent=0 // pred_check_branch
    %16 = sbr.rel (0) target = $region17
  $region16: #{downblock2d_forward.3} parent=0 // pred_region
    _
  $region17: #{downblock2d_forward.3} parent=0 // pred_fallthru
    _
  %v18 = vld [vmem:[%s0] sm:$0xf]
  %v19 = vld [vmem:[%s0 + $0x4] sm:$0xf]
  %v20 = vld [vmem:[%s0 + $0x8] sm:$0xf]
  %v21 = vld [vmem:[%s0 + $0xc] sm:$0xf]
  %v22 = vld [vmem:[%s0 + $0x10] sm:$0xf]
  %v23 = vld [vmem:[%s0 + $0x14] sm:$0xf]
  %v24 = vld [vmem:[%s0 + $0x18] sm:$0xf]
  %v25 = vld [vmem:[%s0 + $0x1c] sm:$0xf]
  %v26 = vld [vmem:[%s0 + $0x20] sm:$0xf]
  %v27 = vld [vmem:[%s0 + $0x24] sm:$0xf]
  %v28 = vld [vmem:[%s0 + $0x28] sm:$0xf]
  %v29 = vld [vmem:[%s0 + $0x2c] sm:$0xf]
  %v30 = vld [vmem:[%s0 + $0x30] sm:$0xf]
  %v31 = vld [vmem:[%s0 + $0x34] sm:$0xf]
  %v32 = vld [vmem:[%s0 + $0x38] sm:$0xf]
  %v33 = vld [vmem:[%s0 + $0x3c] sm:$0xf]
  %v34 = vld [vmem:[%s0 + $0x40] sm:$0xf]
  %v35 = vld [vmem:[%s0 + $0x44] sm:$0xf]
  %v36 = vld [vmem:[%s0 + $0x48] sm:$0xf]
  %v37 = vld [vmem:[%s0 + $0x4c] sm:$0xf]
  %v38 = vld [vmem:[%s0 + $0x50] sm:$0xf]
  %v39 = vld [vmem:[%s0 + $0x54] sm:$0xf]
  %v40 = vld [vmem:[%s0 + $0x58] sm:$0xf]
  %v41 = vld [vmem:[%s0 + $0x5c] sm:$0xf]
  %v42 = vld [vmem:[%s0 + $0x60] sm:$0xf]
  %v43 = vld [vmem:[%s0 + $0x64] sm:$0xf]
  %v44 = vld [vmem:[%s0 + $0x68] sm:$0xf]
  %v45 = vld [vmem:[%s0 + $0x6c] sm:$0xf]
  %v46 = vld [vmem:[%s0 + $0x70] sm:$0xf]
  %v47 = vld [vmem:[%s0 + $0x74] sm:$0xf]
  %v48 = vld [vmem:[%s0 + $0x78] sm:$0xf]
  %v49 = vld [vmem:[%s0 + $0x7c] sm:$0xf]
  %v50 = vld [vmem:[%s0 + $0x80] sm:$0xf]
  %v51 = vld [vmem:[%s0 + $0x84] sm:$0xf]
  %v52 = vld [vmem:[%s0 + $0x88] sm:$0xf]
  %v53 = vld [vmem:[%s0 + $0x8c] sm:$0xf]
  %v54 = vld [vmem:[%s0 + $0x90] sm:$0xf]
  %v55 = vld [vmem:[%s0 + $0x94] sm:$0xf]
  %v56 = vld [vmem:[%s0 + $0x98] sm:$0xf]
  %v57 = vld [vmem:[%s0 + $0x9c] sm:$0xf]
  %v58 = vld [vmem:[%s0 + $0xa0] sm:$0xf]
  %v59 = vld [vmem:[%s0 + $0xa4] sm:$0xf]
  %v60 = vld [vmem:[%s0 + $0xa8] sm:$0xf]
  %v61 = vld [vmem:[%s0 + $0xac] sm:$0xf]
  %v62 = vld [vmem:[%s0 + $0xb0] sm:$0xf]
  %v63 = vld [vmem:[%s0 + $0xb4] sm:$0xf]
  %v64 = vld [vmem:[%s0 + $0xb8] sm:$0xf]
  %v65 = vld [vmem:[%s0 + $0xbc] sm:$0xf]
  %v66 = vld [vmem:[%s0 + $0xc0] sm:$0xf]
  %v67 = vld [vmem:[%s0 + $0xc4] sm:$0xf]
  %v68 = vld [vmem:[%s0 + $0xc8] sm:$0xf]
  %v69 = vld [vmem:[%s0 + $0xcc] sm:$0xf]
  %v70 = vld [vmem:[%s0 + $0xd0] sm:$0xf]
  %v71 = vld [vmem:[%s0 + $0xd4] sm:$0xf]
  %v72 = vld [vmem:[%s0 + $0xd8] sm:$0xf]
  %v73 = vld [vmem:[%s0 + $0xdc] sm:$0xf]
  %v74 = vld [vmem:[%s0 + $0xe0] sm:$0xf]
  %v75 = vld [vmem:[%s0 + $0xe4] sm:$0xf]
  %v76 = vld [vmem:[%s0 + $0xe8] sm:$0xf]
  %v77 = vld [vmem:[%s0 + $0xec] sm:$0xf]
  %v78 = vld [vmem:[%s0 + $0xf0] sm:$0xf]
  %v79 = vld [vmem:[%s0 + $0xf4] sm:$0xf]
  %v80 = vld [vmem:[%s0 + $0xf8] sm:$0xf]
  %v81 = vld [vmem:[%s0 + $0xfc] sm:$0xf]
  %v82 = vunpack.c.l.bf16 %v18
  %v83 = vunpack.c.l.bf16 %v19
  %v84 = vunpack.c.l.bf16 %v20
  %v85 = vunpack.c.l.bf16 %v21
  %v86 = vunpack.c.l.bf16 %v22
  %v87 = vunpack.c.l.bf16 %v23
  %v88 = vunpack.c.l.bf16 %v24
  %v89 = vunpack.c.l.bf16 %v25
  %v90 = vunpack.c.l.bf16 %v26
  %v91 = vunpack.c.l.bf16 %v27
  %v92 = vunpack.c.l.bf16 %v28
  %v93 = vunpack.c.l.bf16 %v29
  %v94 = vunpack.c.l.bf16 %v30
  %v95 = vunpack.c.l.bf16 %v31
  %v96 = vunpack.c.l.bf16 %v32
  %v97 = vunpack.c.l.bf16 %v33
  %v98 = vunpack.c.l.bf16 %v34
  %v99 = vunpack.c.l.bf16 %v35
  %v100 = vunpack.c.l.bf16 %v36
  %v101 = vunpack.c.l.bf16 %v37
  %v102 = vunpack.c.l.bf16 %v38
  %v103 = vunpack.c.l.bf16 %v39
  %v104 = vunpack.c.l.bf16 %v40
  %v105 = vunpack.c.l.bf16 %v41
  %v106 = vunpack.c.l.bf16 %v42
  %v107 = vunpack.c.l.bf16 %v43
  %v108 = vunpack.c.l.bf16 %v44
  %v109 = vunpack.c.l.bf16 %v45
  %v110 = vunpack.c.l.bf16 %v46
  %v111 = vunpack.c.l.bf16 %v47
  %v112 = vunpack.c.l.bf16 %v48
  %v113 = vunpack.c.l.bf16 %v49
  %v114 = vunpack.c.l.bf16 %v50
  %v115 = vunpack.c.l.bf16 %v51
  %v116 = vunpack.c.l.bf16 %v52
  %v117 = vunpack.c.l.bf16 %v53
  %v118 = vunpack.c.l.bf16 %v54
  %v119 = vunpack.c.l.bf16 %v55
  %v120 = vunpack.c.l.bf16 %v56
  %v121 = vunpack.c.l.bf16 %v57
  %v122 = vunpack.c.l.bf16 %v58
  %v123 = vunpack.c.l.bf16 %v59
  %v124 = vunpack.c.l.bf16 %v60
  %v125 = vunpack.c.l.bf16 %v61
  %v126 = vunpack.c.l.bf16 %v62
  %v127 = vunpack.c.l.bf16 %v63
  %v128 = vunpack.c.l.bf16 %v64
  %v129 = vunpack.c.l.bf16 %v65
  %v130 = vunpack.c.l.bf16 %v66
  %v131 = vunpack.c.l.bf16 %v67
  %v132 = vunpack.c.l.bf16 %v68
  %v133 = vunpack.c.l.bf16 %v69
  %v134 = vunpack.c.l.bf16 %v70
  %v135 = vunpack.c.l.bf16 %v71
  %v136 = vunpack.c.l.bf16 %v72
  %v137 = vunpack.c.l.bf16 %v73
  %v138 = vunpack.c.l.bf16 %v74
  %v139 = vunpack.c.l.bf16 %v75
  %v140 = vunpack.c.l.bf16 %v76
  %v141 = vunpack.c.l.bf16 %v77
  %v142 = vunpack.c.l.bf16 %v78
  %v143 = vunpack.c.l.bf16 %v79
  %v144 = vunpack.c.l.bf16 %v80
  %v145 = vunpack.c.l.bf16 %v81
  %v146 = vld [vmem:[%s2] sm:$0x1]
  %v148 = vlaneseq
  %v149 = vshrl.u32 %v148, 7
  %v150 = vsub.s32 0, %v149
  %v151 = vrot.slane %v146, %v150
  %v153 = vmul.f32 %v82, %v151
  %v154 = vmul.f32 %v83, %v151
  %v155 = vmul.f32 %v84, %v151
  %v156 = vmul.f32 %v85, %v151
  %v157 = vmul.f32 %v86, %v151
  %v158 = vmul.f32 %v87, %v151
  %v159 = vmul.f32 %v88, %v151
  %v160 = vmul.f32 %v89, %v151
  %v161 = vmul.f32 %v90, %v151
  %v162 = vmul.f32 %v91, %v151
  %v163 = vmul.f32 %v92, %v151
  %v164 = vmul.f32 %v93, %v151
  %v165 = vmul.f32 %v94, %v151
  %v166 = vmul.f32 %v95, %v151
  %v167 = vmul.f32 %v96, %v151
  %v168 = vmul.f32 %v97, %v151
  %v169 = vmul.f32 %v98, %v151
  %v170 = vmul.f32 %v99, %v151
  %v171 = vmul.f32 %v100, %v151
  %v172 = vmul.f32 %v101, %v151
  %v173 = vmul.f32 %v102, %v151
  %v174 = vmul.f32 %v103, %v151
  %v175 = vmul.f32 %v104, %v151
  %v176 = vmul.f32 %v105, %v151
  %v177 = vmul.f32 %v106, %v151
  %v178 = vmul.f32 %v107, %v151
  %v179 = vmul.f32 %v108, %v151
  %v180 = vmul.f32 %v109, %v151
  %v181 = vmul.f32 %v110, %v151
  %v182 = vmul.f32 %v111, %v151
  %v183 = vmul.f32 %v112, %v151
  %v184 = vmul.f32 %v113, %v151
  %v185 = vmul.f32 %v114, %v151
  %v186 = vmul.f32 %v115, %v151
  %v187 = vmul.f32 %v116, %v151
  %v188 = vmul.f32 %v117, %v151
  %v189 = vmul.f32 %v118, %v151
  %v190 = vmul.f32 %v119, %v151
  %v191 = vmul.f32 %v120, %v151
  %v192 = vmul.f32 %v121, %v151
  %v193 = vmul.f32 %v122, %v151
  %v194 = vmul.f32 %v123, %v151
  %v195 = vmul.f32 %v124, %v151
  %v196 = vmul.f32 %v125, %v151
  %v197 = vmul.f32 %v126, %v151
  %v198 = vmul.f32 %v127, %v151
  %v199 = vmul.f32 %v128, %v151
  %v200 = vmul.f32 %v129, %v151
  %v201 = vmul.f32 %v130, %v151
  %v202 = vmul.f32 %v131, %v151
  %v203 = vmul.f32 %v132, %v151
  %v204 = vmul.f32 %v133, %v151
  %v205 = vmul.f32 %v134, %v151
  %v206 = vmul.f32 %v135, %v151
  %v207 = vmul.f32 %v136, %v151
  %v208 = vmul.f32 %v137, %v151
  %v209 = vmul.f32 %v138, %v151
  %v210 = vmul.f32 %v139, %v151
  %v211 = vmul.f32 %v140, %v151
  %v212 = vmul.f32 %v141, %v151
  %v213 = vmul.f32 %v142, %v151
  %v214 = vmul.f32 %v143, %v151
  %v215 = vmul.f32 %v144, %v151
  %v216 = vmul.f32 %v145, %v151
  %v217 = vld [vmem:[%s3] sm:$0x1]
  %v219 = vlaneseq
  %v220 = vshrl.u32 %v219, 7
  %v221 = vsub.s32 0, %v220
  %v222 = vrot.slane %v217, %v221
  %v224 = vadd.f32 %v153, %v222
  %v225 = vadd.f32 %v154, %v222
  %v226 = vadd.f32 %v155, %v222
  %v227 = vadd.f32 %v156, %v222
  %v228 = vadd.f32 %v157, %v222
  %v229 = vadd.f32 %v158, %v222
  %v230 = vadd.f32 %v159, %v222
  %v231 = vadd.f32 %v160, %v222
  %v232 = vadd.f32 %v161, %v222
  %v233 = vadd.f32 %v162, %v222
  %v234 = vadd.f32 %v163, %v222
  %v235 = vadd.f32 %v164, %v222
  %v236 = vadd.f32 %v165, %v222
  %v237 = vadd.f32 %v166, %v222
  %v238 = vadd.f32 %v167, %v222
  %v239 = vadd.f32 %v168, %v222
  %v240 = vadd.f32 %v169, %v222
  %v241 = vadd.f32 %v170, %v222
  %v242 = vadd.f32 %v171, %v222
  %v243 = vadd.f32 %v172, %v222
  %v244 = vadd.f32 %v173, %v222
  %v245 = vadd.f32 %v174, %v222
  %v246 = vadd.f32 %v175, %v222
  %v247 = vadd.f32 %v176, %v222
  %v248 = vadd.f32 %v177, %v222
  %v249 = vadd.f32 %v178, %v222
  %v250 = vadd.f32 %v179, %v222
  %v251 = vadd.f32 %v180, %v222
  %v252 = vadd.f32 %v181, %v222
  %v253 = vadd.f32 %v182, %v222
  %v254 = vadd.f32 %v183, %v222
  %v255 = vadd.f32 %v184, %v222
  %v256 = vadd.f32 %v185, %v222
  %v257 = vadd.f32 %v186, %v222
  %v258 = vadd.f32 %v187, %v222
  %v259 = vadd.f32 %v188, %v222
  %v260 = vadd.f32 %v189, %v222
  %v261 = vadd.f32 %v190, %v222
  %v262 = vadd.f32 %v191, %v222
  %v263 = vadd.f32 %v192, %v222
  %v264 = vadd.f32 %v193, %v222
  %v265 = vadd.f32 %v194, %v222
  %v266 = vadd.f32 %v195, %v222
  %v267 = vadd.f32 %v196, %v222
  %v268 = vadd.f32 %v197, %v222
  %v269 = vadd.f32 %v198, %v222
  %v270 = vadd.f32 %v199, %v222
  %v271 = vadd.f32 %v200, %v222
  %v272 = vadd.f32 %v201, %v222
  %v273 = vadd.f32 %v202, %v222
  %v274 = vadd.f32 %v203, %v222
  %v275 = vadd.f32 %v204, %v222
  %v276 = vadd.f32 %v205, %v222
  %v277 = vadd.f32 %v206, %v222
  %v278 = vadd.f32 %v207, %v222
  %v279 = vadd.f32 %v208, %v222
  %v280 = vadd.f32 %v209, %v222
  %v281 = vadd.f32 %v210, %v222
  %v282 = vadd.f32 %v211, %v222
  %v283 = vadd.f32 %v212, %v222
  %v284 = vadd.f32 %v213, %v222
  %v285 = vadd.f32 %v214, %v222
  %v286 = vadd.f32 %v215, %v222
  %v287 = vadd.f32 %v216, %v222
  %v288 = vmax.f32 %v224, 0.0
  %v289 = vmax.f32 %v225, 0.0
  %v290 = vmax.f32 %v226, 0.0
  %v291 = vmax.f32 %v227, 0.0
  %v292 = vmax.f32 %v228, 0.0
  %v293 = vmax.f32 %v229, 0.0
  %v294 = vmax.f32 %v230, 0.0
  %v295 = vmax.f32 %v231, 0.0
  %v296 = vmax.f32 %v232, 0.0
  %v297 = vmax.f32 %v233, 0.0
  %v298 = vmax.f32 %v234, 0.0
  %v299 = vmax.f32 %v235, 0.0
  %v300 = vmax.f32 %v236, 0.0
  %v301 = vmax.f32 %v237, 0.0
  %v302 = vmax.f32 %v238, 0.0
  %v303 = vmax.f32 %v239, 0.0
  %v304 = vmax.f32 %v240, 0.0
  %v305 = vmax.f32 %v241, 0.0
  %v306 = vmax.f32 %v242, 0.0
  %v307 = vmax.f32 %v243, 0.0
  %v308 = vmax.f32 %v244, 0.0
  %v309 = vmax.f32 %v245, 0.0
  %v310 = vmax.f32 %v246, 0.0
  %v311 = vmax.f32 %v247, 0.0
  %v312 = vmax.f32 %v248, 0.0
  %v313 = vmax.f32 %v249, 0.0
  %v314 = vmax.f32 %v250, 0.0
  %v315 = vmax.f32 %v251, 0.0
  %v316 = vmax.f32 %v252, 0.0
  %v317 = vmax.f32 %v253, 0.0
  %v318 = vmax.f32 %v254, 0.0
  %v319 = vmax.f32 %v255, 0.0
  %v320 = vmax.f32 %v256, 0.0
  %v321 = vmax.f32 %v257, 0.0
  %v322 = vmax.f32 %v258, 0.0
  %v323 = vmax.f32 %v259, 0.0
  %v324 = vmax.f32 %v260, 0.0
  %v325 = vmax.f32 %v261, 0.0
  %v326 = vmax.f32 %v262, 0.0
  %v327 = vmax.f32 %v263, 0.0
  %v328 = vmax.f32 %v264, 0.0
  %v329 = vmax.f32 %v265, 0.0
  %v330 = vmax.f32 %v266, 0.0
  %v331 = vmax.f32 %v267, 0.0
  %v332 = vmax.f32 %v268, 0.0
  %v333 = vmax.f32 %v269, 0.0
  %v334 = vmax.f32 %v270, 0.0
  %v335 = vmax.f32 %v271, 0.0
  %v336 = vmax.f32 %v272, 0.0
  %v337 = vmax.f32 %v273, 0.0
  %v338 = vmax.f32 %v274, 0.0
  %v339 = vmax.f32 %v275, 0.0
  %v340 = vmax.f32 %v276, 0.0
  %v341 = vmax.f32 %v277, 0.0
  %v342 = vmax.f32 %v278, 0.0
  %v343 = vmax.f32 %v279, 0.0
  %v344 = vmax.f32 %v280, 0.0
  %v345 = vmax.f32 %v281, 0.0
  %v346 = vmax.f32 %v282, 0.0
  %v347 = vmax.f32 %v283, 0.0
  %v348 = vmax.f32 %v284, 0.0
  %v349 = vmax.f32 %v285, 0.0
  %v350 = vmax.f32 %v286, 0.0
  %v351 = vmax.f32 %v287, 0.0
  %v352 = vpack.c.bf16 %v289, %v288
  %v353 = vpack.c.bf16 %v291, %v290
  %v354 = vpack.c.bf16 %v293, %v292
  %v355 = vpack.c.bf16 %v295, %v294
  %v356 = vpack.c.bf16 %v297, %v296
  %v357 = vpack.c.bf16 %v299, %v298
  %v358 = vpack.c.bf16 %v301, %v300
  %v359 = vpack.c.bf16 %v303, %v302
  %v360 = vpack.c.bf16 %v305, %v304
  %v361 = vpack.c.bf16 %v307, %v306
  %v362 = vpack.c.bf16 %v309, %v308
  %v363 = vpack.c.bf16 %v311, %v310
  %v364 = vpack.c.bf16 %v313, %v312
  %v365 = vpack.c.bf16 %v315, %v314
  %v366 = vpack.c.bf16 %v317, %v316
  %v367 = vpack.c.bf16 %v319, %v318
  %v368 = vpack.c.bf16 %v321, %v320
  %v369 = vpack.c.bf16 %v323, %v322
  %v370 = vpack.c.bf16 %v325, %v324
  %v371 = vpack.c.bf16 %v327, %v326
  %v372 = vpack.c.bf16 %v329, %v328
  %v373 = vpack.c.bf16 %v331, %v330
  %v374 = vpack.c.bf16 %v333, %v332
  %v375 = vpack.c.bf16 %v335, %v334
  %v376 = vpack.c.bf16 %v337, %v336
  %v377 = vpack.c.bf16 %v339, %v338
  %v378 = vpack.c.bf16 %v341, %v340
  %v379 = vpack.c.bf16 %v343, %v342
  %v380 = vpack.c.bf16 %v345, %v344
  %v381 = vpack.c.bf16 %v347, %v346
  %v382 = vpack.c.bf16 %v349, %v348
  %v383 = vpack.c.bf16 %v351, %v350
  %v384 = vld [vmem:[%s1] sm:$0xf]
  %vm385 = vcmask 261120
  %v387 = vsel %vm385, %v384, 0
  %389 = vmatprep.subr.bf16.mxu0 0
  %390 = vmatpush1.bf16.msra.mxu0 %v352
  %391 = vmatprep.subr.bf16.mxu0 0
  %392 = vmatpush1.bf16.msra.mxu0 %v353
  %393 = vmatprep.subr.bf16.mxu0 0
  %394 = vmatpush1.bf16.msra.mxu0 0
  %395 = vmatprep.subr.bf16.mxu0 0
  %396 = vmatpush1.bf16.msra.mxu0 0
  %397 = vmatprep.subr.bf16.mxu0 0
  %398 = vmatpush1.bf16.msra.mxu0 0
  %399 = vmatprep.subr.bf16.mxu0 0
  %400 = vmatpush1.bf16.msra.mxu0 0
  %401 = vmatprep.subr.bf16.mxu0 0
  %402 = vmatpush1.bf16.msra.mxu0 0
  %403 = vmatprep.subr.bf16.mxu0 0
  %404 = vmatpush1.bf16.msra.mxu0 0
  %405 = vmatprep.subr.bf16.mxu0 0
  %406 = vmatpush1.bf16.msra.mxu0 0
  %407 = vmatprep.subr.bf16.mxu0 0
  %408 = vmatpush1.bf16.msra.mxu0 0
  %409 = vmatprep.subr.bf16.mxu0 0
  %410 = vmatpush1.bf16.msra.mxu0 0
  %411 = vmatprep.subr.bf16.mxu0 0
  %412 = vmatpush1.bf16.msra.mxu0 0
  %413 = vmatprep.subr.bf16.mxu0 0
  %414 = vmatpush1.bf16.msra.mxu0 0
  %415 = vmatprep.subr.bf16.mxu0 0
  %416 = vmatpush1.bf16.msra.mxu0 0
  %417 = vmatprep.subr.bf16.mxu0 0
  %418 = vmatpush1.bf16.msra.mxu0 0
  %419 = vmatprep.subr.bf16.mxu0 0
  %420 = vmatpush1.bf16.msra.mxu0 0
  %421 = vmatprep.mubr.bf16.mxu0 0
  %422 = vmatmul.mubr.bf16.gmra.mrb[0].mxu0 %v387
  %v423 = vpop.f32.mrb[0].mxu0
  %v424 = vadd.f32 0.0, %v423
  %v425 = vpop.f32.mrb[0].mxu0
  %v426 = vpop.f32.mrb[0].mxu0
  %v427 = vpop.f32.mrb[0].mxu0
  %428 = vdwg.mxu0
  %429 = vst [vmem:[%s4] sm:$0xff] %v424
  %430 = vmatprep.subr.bf16.mxu0 0
  %431 = vmatpush1.bf16.msra.mxu0 %v354
  %432 = vmatprep.subr.bf16.mxu0 0
  %433 = vmatpush1.bf16.msra.mxu0 %v355
  %434 = vmatprep.subr.bf16.mxu0 0
  %435 = vmatpush1.bf16.msra.mxu0 0
  %436 = vmatprep.subr.bf16.mxu0 0
  %437 = vmatpush1.bf16.msra.mxu0 0
  %438 = vmatprep.subr.bf16.mxu0 0
  %439 = vmatpush1.bf16.msra.mxu0 0
  %440 = vmatprep.subr.bf16.mxu0 0
  %441 = vmatpush1.bf16.msra.mxu0 0
  %442 = vmatprep.subr.bf16.mxu0 0
  %443 = vmatpush1.bf16.msra.mxu0 0
  %444 = vmatprep.subr.bf16.mxu0 0
  %445 = vmatpush1.bf16.msra.mxu0 0
  %446 = vmatprep.subr.bf16.mxu0 0
  %447 = vmatpush1.bf16.msra.mxu0 0
  %448 = vmatprep.subr.bf16.mxu0 0
  %449 = vmatpush1.bf16.msra.mxu0 0
  %450 = vmatprep.subr.bf16.mxu0 0
  %451 = vmatpush1.bf16.msra.mxu0 0
  %452 = vmatprep.subr.bf16.mxu0 0
  %453 = vmatpush1.bf16.msra.mxu0 0
  %454 = vmatprep.subr.bf16.mxu0 0
  %455 = vmatpush1.bf16.msra.mxu0 0
  %456 = vmatprep.subr.bf16.mxu0 0
  %457 = vmatpush1.bf16.msra.mxu0 0
  %458 = vmatprep.subr.bf16.mxu0 0
  %459 = vmatpush1.bf16.msra.mxu0 0
  %460 = vmatprep.subr.bf16.mxu0 0
  %461 = vmatpush1.bf16.msra.mxu0 0
  %462 = vmatprep.mubr.bf16.mxu0 0
  %463 = vmatmul.mubr.bf16.gmra.mrb[0].mxu0 %v387
  %v464 = vpop.f32.mrb[0].mxu0
  %v465 = vadd.f32 0.0, %v464
  %v466 = vpop.f32.mrb[0].mxu0
  %v467 = vpop.f32.mrb[0].mxu0
  %v468 = vpop.f32.mrb[0].mxu0
  %469 = vdwg.mxu0
  %470 = vst [vmem:[%s4 + $0x8] sm:$0xff] %v465
  %471 = vmatprep.subr.bf16.mxu0 0
  %472 = vmatpush1.bf16.msra.mxu0 %v356
  %473 = vmatprep.subr.bf16.mxu0 0
  %474 = vmatpush1.bf16.msra.mxu0 %v357
  %475 = vmatprep.subr.bf16.mxu0 0
  %476 = vmatpush1.bf16.msra.mxu0 0
  %477 = vmatprep.subr.bf16.mxu0 0
  %478 = vmatpush1.bf16.msra.mxu0 0
  %479 = vmatprep.subr.bf16.mxu0 0
  %480 = vmatpush1.bf16.msra.mxu0 0
  %481 = vmatprep.subr.bf16.mxu0 0
  %482 = vmatpush1.bf16.msra.mxu0 0
  %483 = vmatprep.subr.bf16.mxu0 0
  %484 = vmatpush1.bf16.msra.mxu0 0
  %485 = vmatprep.subr.bf16.mxu0 0
  %486 = vmatpush1.bf16.msra.mxu0 0
  %487 = vmatprep.subr.bf16.mxu0 0
  %488 = vmatpush1.bf16.msra.mxu0 0
  %489 = vmatprep.subr.bf16.mxu0 0
  %490 = vmatpush1.bf16.msra.mxu0 0
  %491 = vmatprep.subr.bf16.mxu0 0
  %492 = vmatpush1.bf16.msra.mxu0 0
  %493 = vmatprep.subr.bf16.mxu0 0
  %494 = vmatpush1.bf16.msra.mxu0 0
  %495 = vmatprep.subr.bf16.mxu0 0
  %496 = vmatpush1.bf16.msra.mxu0 0
  %497 = vmatprep.subr.bf16.mxu0 0
  %498 = vmatpush1.bf16.msra.mxu0 0
  %499 = vmatprep.subr.bf16.mxu0 0
  %500 = vmatpush1.bf16.msra.mxu0 0
  %501 = vmatprep.subr.bf16.mxu0 0
  %502 = vmatpush1.bf16.msra.mxu0 0
  %503 = vmatprep.mubr.bf16.mxu0 0
  %504 = vmatmul.mubr.bf16.gmra.mrb[0].mxu0 %v387
  %v505 = vpop.f32.mrb[0].mxu0
  %v506 = vadd.f32 0.0, %v505
  %v507 = vpop.f32.mrb[0].mxu0
  %v508 = vpop.f32.mrb[0].mxu0
  %v509 = vpop.f32.mrb[0].mxu0
  %510 = vdwg.mxu0
  %511 = vst [vmem:[%s4 + $0x10] sm:$0xff] %v506
  %512 = vmatprep.subr.bf16.mxu0 0
  %513 = vmatpush1.bf16.msra.mxu0 %v358
  %514 = vmatprep.subr.bf16.mxu0 0
  %515 = vmatpush1.bf16.msra.mxu0 %v359
  %516 = vmatprep.subr.bf16.mxu0 0
  %517 = vmatpush1.bf16.msra.mxu0 0
  %518 = vmatprep.subr.bf16.mxu0 0
  %519 = vmatpush1.bf16.msra.mxu0 0
  %520 = vmatprep.subr.bf16.mxu0 0
  %521 = vmatpush1.bf16.msra.mxu0 0
  %522 = vmatprep.subr.bf16.mxu0 0
  %523 = vmatpush1.bf16.msra.mxu0 0
  %524 = vmatprep.subr.bf16.mxu0 0
  %525 = vmatpush1.bf16.msra.mxu0 0
  %526 = vmatprep.subr.bf16.mxu0 0
  %527 = vmatpush1.bf16.msra.mxu0 0
  %528 = vmatprep.subr.bf16.mxu0 0
  %529 = vmatpush1.bf16.msra.mxu0 0
  %530 = vmatprep.subr.bf16.mxu0 0
  %531 = vmatpush1.bf16.msra.mxu0 0
  %532 = vmatprep.subr.bf16.mxu0 0
  %533 = vmatpush1.bf16.msra.mxu0 0
  %534 = vmatprep.subr.bf16.mxu0 0
  %535 = vmatpush1.bf16.msra.mxu0 0
  %536 = vmatprep.subr.bf16.mxu0 0
  %537 = vmatpush1.bf16.msra.mxu0 0
  %538 = vmatprep.subr.bf16.mxu0 0
  %539 = vmatpush1.bf16.msra.mxu0 0
  %540 = vmatprep.subr.bf16.mxu0 0
  %541 = vmatpush1.bf16.msra.mxu0 0
  %542 = vmatprep.subr.bf16.mxu0 0
  %543 = vmatpush1.bf16.msra.mxu0 0
  %544 = vmatprep.mubr.bf16.mxu0 0
  %545 = vmatmul.mubr.bf16.gmra.mrb[0].mxu0 %v387
  %v546 = vpop.f32.mrb[0].mxu0
  %v547 = vadd.f32 0.0, %v546
  %v548 = vpop.f32.mrb[0].mxu0
  %v549 = vpop.f32.mrb[0].mxu0
  %v550 = vpop.f32.mrb[0].mxu0
  %551 = vdwg.mxu0
  %552 = vst [vmem:[%s4 + $0x18] sm:$0xff] %v547
  %553 = vmatprep.subr.bf16.mxu0 0
  %554 = vmatpush1.bf16.msra.mxu0 %v360
  %555 = vmatprep.subr.bf16.mxu0 0
  %556 = vmatpush1.bf16.msra.mxu0 %v361
  %557 = vmatprep.subr.bf16.mxu0 0
  %558 = vmatpush1.bf16.msra.mxu0 0
  %559 = vmatprep.subr.bf16.mxu0 0
  %560 = vmatpush1.bf16.msra.mxu0 0
  %561 = vmatprep.subr.bf16.mxu0 0
  %562 = vmatpush1.bf16.msra.mxu0 0
  %563 = vmatprep.subr.bf16.mxu0 0
  %564 = vmatpush1.bf16.msra.mxu0 0
  %565 = vmatprep.subr.bf16.mxu0 0
  %566 = vmatpush1.bf16.msra.mxu0 0
  %567 = vmatprep.subr.bf16.mxu0 0
  %568 = vmatpush1.bf16.msra.mxu0 0
  %569 = vmatprep.subr.bf16.mxu0 0
  %570 = vmatpush1.bf16.msra.mxu0 0
  %571 = vmatprep.subr.bf16.mxu0 0
  %572 = vmatpush1.bf16.msra.mxu0 0
  %573 = vmatprep.subr.bf16.mxu0 0
  %574 = vmatpush1.bf16.msra.mxu0 0
  %575 = vmatprep.subr.bf16.mxu0 0
  %576 = vmatpush1.bf16.msra.mxu0 0
  %577 = vmatprep.subr.bf16.mxu0 0
  %578 = vmatpush1.bf16.msra.mxu0 0
  %579 = vmatprep.subr.bf16.mxu0 0
  %580 = vmatpush1.bf16.msra.mxu0 0
  %581 = vmatprep.subr.bf16.mxu0 0
  %582 = vmatpush1.bf16.msra.mxu0 0
  %583 = vmatprep.subr.bf16.mxu0 0
  %584 = vmatpush1.bf16.msra.mxu0 0
  %585 = vmatprep.mubr.bf16.mxu0 0
  %586 = vmatmul.mubr.bf16.gmra.mrb[0].mxu0 %v387
  %v587 = vpop.f32.mrb[0].mxu0
  %v588 = vadd.f32 0.0, %v587
  %v589 = vpop.f32.mrb[0].mxu0
  %v590 = vpop.f32.mrb[0].mxu0
  %v591 = vpop.f32.mrb[0].mxu0
  %592 = vdwg.mxu0
  %593 = vst [vmem:[%s4 + $0x20] sm:$0xff] %v588
  %594 = vmatprep.subr.bf16.mxu0 0
  %595 = vmatpush1.bf16.msra.mxu0 %v362
  %596 = vmatprep.subr.bf16.mxu0 0
  %597 = vmatpush1.bf16.msra.mxu0 %v363
  %598 = vmatprep.subr.bf16.mxu0 0
  %599 = vmatpush1.bf16.msra.mxu0 0
  %600 = vmatprep.subr.bf16.mxu0 0
  %601 = vmatpush1.bf16.msra.mxu0 0
  %602 = vmatprep.subr.bf16.mxu0 0
  %603 = vmatpush1.bf16.msra.mxu0 0
  %604 = vmatprep.subr.bf16.mxu0 0
  %605 = vmatpush1.bf16.msra.mxu0 0
  %606 = vmatprep.subr.bf16.mxu0 0
  %607 = vmatpush1.bf16.msra.mxu0 0
  %608 = vmatprep.subr.bf16.mxu0 0
  %609 = vmatpush1.bf16.msra.mxu0 0
  %610 = vmatprep.subr.bf16.mxu0 0
  %611 = vmatpush1.bf16.msra.mxu0 0
  %612 = vmatprep.subr.bf16.mxu0 0
  %613 = vmatpush1.bf16.msra.mxu0 0
  %614 = vmatprep.subr.bf16.mxu0 0
  %615 = vmatpush1.bf16.msra.mxu0 0
  %616 = vmatprep.subr.bf16.mxu0 0
  %617 = vmatpush1.bf16.msra.mxu0 0
  %618 = vmatprep.subr.bf16.mxu0 0
  %619 = vmatpush1.bf16.msra.mxu0 0
  %620 = vmatprep.subr.bf16.mxu0 0
  %621 = vmatpush1.bf16.msra.mxu0 0
  %622 = vmatprep.subr.bf16.mxu0 0
  %623 = vmatpush1.bf16.msra.mxu0 0
  %624 = vmatprep.subr.bf16.mxu0 0
  %625 = vmatpush1.bf16.msra.mxu0 0
  %626 = vmatprep.mubr.bf16.mxu0 0
  %627 = vmatmul.mubr.bf16.gmra.mrb[0].mxu0 %v387
  %v628 = vpop.f32.mrb[0].mxu0
  %v629 = vadd.f32 0.0, %v628
  %v630 = vpop.f32.mrb[0].mxu0
  %v631 = vpop.f32.mrb[0].mxu0
  %v632 = vpop.f32.mrb[0].mxu0
  %633 = vdwg.mxu0
  %634 = vst [vmem:[%s4 + $0x28] sm:$0xff] %v629
  %635 = vmatprep.subr.bf16.mxu0 0
  %636 = vmatpush1.bf16.msra.mxu0 %v364
  %637 = vmatprep.subr.bf16.mxu0 0
  %638 = vmatpush1.bf16.msra.mxu0 %v365
  %639 = vmatprep.subr.bf16.mxu0 0
  %640 = vmatpush1.bf16.msra.mxu0 0
  %641 = vmatprep.subr.bf16.mxu0 0
  %642 = vmatpush1.bf16.msra.mxu0 0
  %643 = vmatprep.subr.bf16.mxu0 0
  %644 = vmatpush1.bf16.msra.mxu0 0
  %645 = vmatprep.subr.bf16.mxu0 0
  %646 = vmatpush1.bf16.msra.mxu0 0
  %647 = vmatprep.subr.bf16.mxu0 0
  %648 = vmatpush1.bf16.msra.mxu0 0
  %649 = vmatprep.subr.bf16.mxu0 0
  %650 = vmatpush1.bf16.msra.mxu0 0
  %651 = vmatprep.subr.bf16.mxu0 0
  %652 = vmatpush1.bf16.msra.mxu0 0
  %653 = vmatprep.subr.bf16.mxu0 0
  %654 = vmatpush1.bf16.msra.mxu0 0
  %655 = vmatprep.subr.bf16.mxu0 0
  %656 = vmatpush1.bf16.msra.mxu0 0
  %657 = vmatprep.subr.bf16.mxu0 0
  %658 = vmatpush1.bf16.msra.mxu0 0
  %659 = vmatprep.subr.bf16.mxu0 0
  %660 = vmatpush1.bf16.msra.mxu0 0
  %661 = vmatprep.subr.bf16.mxu0 0
  %662 = vmatpush1.bf16.msra.mxu0 0
  %663 = vmatprep.subr.bf16.mxu0 0
  %664 = vmatpush1.bf16.msra.mxu0 0
  %665 = vmatprep.subr.bf16.mxu0 0
  %666 = vmatpush1.bf16.msra.mxu0 0
  %667 = vmatprep.mubr.bf16.mxu0 0
  %668 = vmatmul.mubr.bf16.gmra.mrb[0].mxu0 %v387
  %v669 = vpop.f32.mrb[0].mxu0
  %v670 = vadd.f32 0.0, %v669
  %v671 = vpop.f32.mrb[0].mxu0
  %v672 = vpop.f32.mrb[0].mxu0
  %v673 = vpop.f32.mrb[0].mxu0
  %674 = vdwg.mxu0
  %675 = vst [vmem:[%s4 + $0x30] sm:$0xff] %v670
  %676 = vmatprep.subr.bf16.mxu0 0
  %677 = vmatpush1.bf16.msra.mxu0 %v366
  %678 = vmatprep.subr.bf16.mxu0 0
  %679 = vmatpush1.bf16.msra.mxu0 %v367
  %680 = vmatprep.subr.bf16.mxu0 0
  %681 = vmatpush1.bf16.msra.mxu0 0
  %682 = vmatprep.subr.bf16.mxu0 0
  %683 = vmatpush1.bf16.msra.mxu0 0
  %684 = vmatprep.subr.bf16.mxu0 0
  %685 = vmatpush1.bf16.msra.mxu0 0
  %686 = vmatprep.subr.bf16.mxu0 0
  %687 = vmatpush1.bf16.msra.mxu0 0
  %688 = vmatprep.subr.bf16.mxu0 0
  %689 = vmatpush1.bf16.msra.mxu0 0
  %690 = vmatprep.subr.bf16.mxu0 0
  %691 = vmatpush1.bf16.msra.mxu0 0
  %692 = vmatprep.subr.bf16.mxu0 0
  %693 = vmatpush1.bf16.msra.mxu0 0
  %694 = vmatprep.subr.bf16.mxu0 0
  %695 = vmatpush1.bf16.msra.mxu0 0
  %696 = vmatprep.subr.bf16.mxu0 0
  %697 = vmatpush1.bf16.msra.mxu0 0
  %698 = vmatprep.subr.bf16.mxu0 0
  %699 = vmatpush1.bf16.msra.mxu0 0
  %700 = vmatprep.subr.bf16.mxu0 0
  %701 = vmatpush1.bf16.msra.mxu0 0
  %702 = vmatprep.subr.bf16.mxu0 0
  %703 = vmatpush1.bf16.msra.mxu0 0
  %704 = vmatprep.subr.bf16.mxu0 0
  %705 = vmatpush1.bf16.msra.mxu0 0
  %706 = vmatprep.subr.bf16.mxu0 0
  %707 = vmatpush1.bf16.msra.mxu0 0
  %708 = vmatprep.mubr.bf16.mxu0 0
  %709 = vmatmul.mubr.bf16.gmra.mrb[0].mxu0 %v387
  %v710 = vpop.f32.mrb[0].mxu0
  %v711 = vadd.f32 0.0, %v710
  %v712 = vpop.f32.mrb[0].mxu0
  %v713 = vpop.f32.mrb[0].mxu0
  %v714 = vpop.f32.mrb[0].mxu0
  %715 = vdwg.mxu0
  %716 = vst [vmem:[%s4 + $0x38] sm:$0xff] %v711
  %717 = vmatprep.subr.bf16.mxu0 0
  %718 = vmatpush1.bf16.msra.mxu0 %v368
  %719 = vmatprep.subr.bf16.mxu0 0
  %720 = vmatpush1.bf16.msra.mxu0 %v369
  %721 = vmatprep.subr.bf16.mxu0 0
  %722 = vmatpush1.bf16.msra.mxu0 0
  %723 = vmatprep.subr.bf16.mxu0 0
  %724 = vmatpush1.bf16.msra.mxu0 0
  %725 = vmatprep.subr.bf16.mxu0 0
  %726 = vmatpush1.bf16.msra.mxu0 0
  %727 = vmatprep.subr.bf16.mxu0 0
  %728 = vmatpush1.bf16.msra.mxu0 0
  %729 = vmatprep.subr.bf16.mxu0 0
  %730 = vmatpush1.bf16.msra.mxu0 0
  %731 = vmatprep.subr.bf16.mxu0 0
  %732 = vmatpush1.bf16.msra.mxu0 0
  %733 = vmatprep.subr.bf16.mxu0 0
  %734 = vmatpush1.bf16.msra.mxu0 0
  %735 = vmatprep.subr.bf16.mxu0 0
  %736 = vmatpush1.bf16.msra.mxu0 0
  %737 = vmatprep.subr.bf16.mxu0 0
  %738 = vmatpush1.bf16.msra.mxu0 0
  %739 = vmatprep.subr.bf16.mxu0 0
  %740 = vmatpush1.bf16.msra.mxu0 0
  %741 = vmatprep.subr.bf16.mxu0 0
  %742 = vmatpush1.bf16.msra.mxu0 0
  %743 = vmatprep.subr.bf16.mxu0 0
  %744 = vmatpush1.bf16.msra.mxu0 0
  %745 = vmatprep.subr.bf16.mxu0 0
  %746 = vmatpush1.bf16.msra.mxu0 0
  %747 = vmatprep.subr.bf16.mxu0 0
  %748 = vmatpush1.bf16.msra.mxu0 0
  %749 = vmatprep.mubr.bf16.mxu0 0
  %750 = vmatmul.mubr.bf16.gmra.mrb[0].mxu0 %v387
  %v751 = vpop.f32.mrb[0].mxu0
  %v752 = vadd.f32 0.0, %v751
  %v753 = vpop.f32.mrb[0].mxu0
  %v754 = vpop.f32.mrb[0].mxu0
  %v755 = vpop.f32.mrb[0].mxu0
  %756 = vdwg.mxu0
  %757 = vst [vmem:[%s4 + $0x40] sm:$0xff] %v752
  %758 = vmatprep.subr.bf16.mxu0 0
  %759 = vmatpush1.bf16.msra.mxu0 %v370
  %760 = vmatprep.subr.bf16.mxu0 0
  %761 = vmatpush1.bf16.msra.mxu0 %v371
  %762 = vmatprep.subr.bf16.mxu0 0
  %763 = vmatpush1.bf16.msra.mxu0 0
  %764 = vmatprep.subr.bf16.mxu0 0
  %765 = vmatpush1.bf16.msra.mxu0 0
  %766 = vmatprep.subr.bf16.mxu0 0
  %767 = vmatpush1.bf16.msra.mxu0 0
  %768 = vmatprep.subr.bf16.mxu0 0
  %769 = vmatpush1.bf16.msra.mxu0 0
  %770 = vmatprep.subr.bf16.mxu0 0
  %771 = vmatpush1.bf16.msra.mxu0 0
  %772 = vmatprep.subr.bf16.mxu0 0
  %773 = vmatpush1.bf16.msra.mxu0 0
  %774 = vmatprep.subr.bf16.mxu0 0
  %775 = vmatpush1.bf16.msra.mxu0 0
  %776 = vmatprep.subr.bf16.mxu0 0
  %777 = vmatpush1.bf16.msra.mxu0 0
  %778 = vmatprep.subr.bf16.mxu0 0
  %779 = vmatpush1.bf16.msra.mxu0 0
  %780 = vmatprep.subr.bf16.mxu0 0
  %781 = vmatpush1.bf16.msra.mxu0 0
  %782 = vmatprep.subr.bf16.mxu0 0
  %783 = vmatpush1.bf16.msra.mxu0 0
  %784 = vmatprep.subr.bf16.mxu0 0
  %785 = vmatpush1.bf16.msra.mxu0 0
  %786 = vmatprep.subr.bf16.mxu0 0
  %787 = vmatpush1.bf16.msra.mxu0 0
  %788 = vmatprep.subr.bf16.mxu0 0
  %789 = vmatpush1.bf16.msra.mxu0 0
  %790 = vmatprep.mubr.bf16.mxu0 0
  %791 = vmatmul.mubr.bf16.gmra.mrb[0].mxu0 %v387
  %v792 = vpop.f32.mrb[0].mxu0
  %v793 = vadd.f32 0.0, %v792
  %v794 = vpop.f32.mrb[0].mxu0
  %v795 = vpop.f32.mrb[0].mxu0
  %v796 = vpop.f32.mrb[0].mxu0
  %797 = vdwg.mxu0
  %798 = vst [vmem:[%s4 + $0x48] sm:$0xff] %v793
  %799 = vmatprep.subr.bf16.mxu0 0
  %800 = vmatpush1.bf16.msra.mxu0 %v372
  %801 = vmatprep.subr.bf16.mxu0 0
  %802 = vmatpush1.bf16.msra.mxu0 %v373
  %803 = vmatprep.subr.bf16.mxu0 0
  %804 = vmatpush1.bf16.msra.mxu0 0
  %805 = vmatprep.subr.bf16.mxu0 0
  %806 = vmatpush1.bf16.msra.mxu0 0
  %807 = vmatprep.subr.bf16.mxu0 0
  %808 = vmatpush1.bf16.msra.mxu0 0
  %809 = vmatprep.subr.bf16.mxu0 0
  %810 = vmatpush1.bf16.msra.mxu0 0
  %811 = vmatprep.subr.bf16.mxu0 0
  %812 = vmatpush1.bf16.msra.mxu0 0
  %813 = vmatprep.subr.bf16.mxu0 0
  %814 = vmatpush1.bf16.msra.mxu0 0
  %815 = vmatprep.subr.bf16.mxu0 0
  %816 = vmatpush1.bf16.msra.mxu0 0
  %817 = vmatprep.subr.bf16.mxu0 0
  %818 = vmatpush1.bf16.msra.mxu0 0
  %819 = vmatprep.subr.bf16.mxu0 0
  %820 = vmatpush1.bf16.msra.mxu0 0
  %821 = vmatprep.subr.bf16.mxu0 0
  %822 = vmatpush1.bf16.msra.mxu0 0
  %823 = vmatprep.subr.bf16.mxu0 0
  %824 = vmatpush1.bf16.msra.mxu0 0
  %825 = vmatprep.subr.bf16.mxu0 0
  %826 = vmatpush1.bf16.msra.mxu0 0
  %827 = vmatprep.subr.bf16.mxu0 0
  %828 = vmatpush1.bf16.msra.mxu0 0
  %829 = vmatprep.subr.bf16.mxu0 0
  %830 = vmatpush1.bf16.msra.mxu0 0
  %831 = vmatprep.mubr.bf16.mxu0 0
  %832 = vmatmul.mubr.bf16.gmra.mrb[0].mxu0 %v387
  %v833 = vpop.f32.mrb[0].mxu0
  %v834 = vadd.f32 0.0, %v833
  %v835 = vpop.f32.mrb[0].mxu0
  %v836 = vpop.f32.mrb[0].mxu0
  %v837 = vpop.f32.mrb[0].mxu0
  %838 = vdwg.mxu0
  %839 = vst [vmem:[%s4 + $0x50] sm:$0xff] %v834
  %840 = vmatprep.subr.bf16.mxu0 0
  %841 = vmatpush1.bf16.msra.mxu0 %v374
  %842 = vmatprep.subr.bf16.mxu0 0
  %843 = vmatpush1.bf16.msra.mxu0 %v375
  %844 = vmatprep.subr.bf16.mxu0 0
  %845 = vmatpush1.bf16.msra.mxu0 0
  %846 = vmatprep.subr.bf16.mxu0 0
  %847 = vmatpush1.bf16.msra.mxu0 0
  %848 = vmatprep.subr.bf16.mxu0 0
  %849 = vmatpush1.bf16.msra.mxu0 0
  %850 = vmatprep.subr.bf16.mxu0 0
  %851 = vmatpush1.bf16.msra.mxu0 0
  %852 = vmatprep.subr.bf16.mxu0 0
  %853 = vmatpush1.bf16.msra.mxu0 0
  %854 = vmatprep.subr.bf16.mxu0 0
  %855 = vmatpush1.bf16.msra.mxu0 0
  %856 = vmatprep.subr.bf16.mxu0 0
  %857 = vmatpush1.bf16.msra.mxu0 0
  %858 = vmatprep.subr.bf16.mxu0 0
  %859 = vmatpush1.bf16.msra.mxu0 0
  %860 = vmatprep.subr.bf16.mxu0 0
  %861 = vmatpush1.bf16.msra.mxu0 0
  %862 = vmatprep.subr.bf16.mxu0 0
  %863 = vmatpush1.bf16.msra.mxu0 0
  %864 = vmatprep.subr.bf16.mxu0 0
  %865 = vmatpush1.bf16.msra.mxu0 0
  %866 = vmatprep.subr.bf16.mxu0 0
  %867 = vmatpush1.bf16.msra.mxu0 0
  %868 = vmatprep.subr.bf16.mxu0 0
  %869 = vmatpush1.bf16.msra.mxu0 0
  %870 = vmatprep.subr.bf16.mxu0 0
  %871 = vmatpush1.bf16.msra.mxu0 0
  %872 = vmatprep.mubr.bf16.mxu0 0
  %873 = vmatmul.mubr.bf16.gmra.mrb[0].mxu0 %v387
  %v874 = vpop.f32.mrb[0].mxu0
  %v875 = vadd.f32 0.0, %v874
  %v876 = vpop.f32.mrb[0].mxu0
  %v877 = vpop.f32.mrb[0].mxu0
  %v878 = vpop.f32.mrb[0].mxu0
  %879 = vdwg.mxu0
  %880 = vst [vmem:[%s4 + $0x58] sm:$0xff] %v875
  %881 = vmatprep.subr.bf16.mxu0 0
  %882 = vmatpush1.bf16.msra.mxu0 %v376
  %883 = vmatprep.subr.bf16.mxu0 0
  %884 = vmatpush1.bf16.msra.mxu0 %v377
  %885 = vmatprep.subr.bf16.mxu0 0
  %886 = vmatpush1.bf16.msra.mxu0 0
  %887 = vmatprep.subr.bf16.mxu0 0
  %888 = vmatpush1.bf16.msra.mxu0 0
  %889 = vmatprep.subr.bf16.mxu0 0
  %890 = vmatpush1.bf16.msra.mxu0 0
  %891 = vmatprep.subr.bf16.mxu0 0
  %892 = vmatpush1.bf16.msra.mxu0 0
  %893 = vmatprep.subr.bf16.mxu0 0
  %894 = vmatpush1.bf16.msra.mxu0 0
  %895 = vmatprep.subr.bf16.mxu0 0
  %896 = vmatpush1.bf16.msra.mxu0 0
  %897 = vmatprep.subr.bf16.mxu0 0
  %898 = vmatpush1.bf16.msra.mxu0 0
  %899 = vmatprep.subr.bf16.mxu0 0
  %900 = vmatpush1.bf16.msra.mxu0 0
  %901 = vmatprep.subr.bf16.mxu0 0
  %902 = vmatpush1.bf16.msra.mxu0 0
  %903 = vmatprep.subr.bf16.mxu0 0
  %904 = vmatpush1.bf16.msra.mxu0 0
  %905 = vmatprep.subr.bf16.mxu0 0
  %906 = vmatpush1.bf16.msra.mxu0 0
  %907 = vmatprep.subr.bf16.mxu0 0
  %908 = vmatpush1.bf16.msra.mxu0 0
  %909 = vmatprep.subr.bf16.mxu0 0
  %910 = vmatpush1.bf16.msra.mxu0 0
  %911 = vmatprep.subr.bf16.mxu0 0
  %912 = vmatpush1.bf16.msra.mxu0 0
  %913 = vmatprep.mubr.bf16.mxu0 0
  %914 = vmatmul.mubr.bf16.gmra.mrb[0].mxu0 %v387
  %v915 = vpop.f32.mrb[0].mxu0
  %v916 = vadd.f32 0.0, %v915
  %v917 = vpop.f32.mrb[0].mxu0
  %v918 = vpop.f32.mrb[0].mxu0
  %v919 = vpop.f32.mrb[0].mxu0
  %920 = vdwg.mxu0
  %921 = vst [vmem:[%s4 + $0x60] sm:$0xff] %v916
  %922 = vmatprep.subr.bf16.mxu0 0
  %923 = vmatpush1.bf16.msra.mxu0 %v378
  %924 = vmatprep.subr.bf16.mxu0 0
  %925 = vmatpush1.bf16.msra.mxu0 %v379
  %926 = vmatprep.subr.bf16.mxu0 0
  %927 = vmatpush1.bf16.msra.mxu0 0
  %928 = vmatprep.subr.bf16.mxu0 0
  %929 = vmatpush1.bf16.msra.mxu0 0
  %930 = vmatprep.subr.bf16.mxu0 0
  %931 = vmatpush1.bf16.msra.mxu0 0
  %932 = vmatprep.subr.bf16.mxu0 0
  %933 = vmatpush1.bf16.msra.mxu0 0
  %934 = vmatprep.subr.bf16.mxu0 0
  %935 = vmatpush1.bf16.msra.mxu0 0
  %936 = vmatprep.subr.bf16.mxu0 0
  %937 = vmatpush1.bf16.msra.mxu0 0
  %938 = vmatprep.subr.bf16.mxu0 0
  %939 = vmatpush1.bf16.msra.mxu0 0
  %940 = vmatprep.subr.bf16.mxu0 0
  %941 = vmatpush1.bf16.msra.mxu0 0
  %942 = vmatprep.subr.bf16.mxu0 0
  %943 = vmatpush1.bf16.msra.mxu0 0
  %944 = vmatprep.subr.bf16.mxu0 0
  %945 = vmatpush1.bf16.msra.mxu0 0
  %946 = vmatprep.subr.bf16.mxu0 0
  %947 = vmatpush1.bf16.msra.mxu0 0
  %948 = vmatprep.subr.bf16.mxu0 0
  %949 = vmatpush1.bf16.msra.mxu0 0
  %950 = vmatprep.subr.bf16.mxu0 0
  %951 = vmatpush1.bf16.msra.mxu0 0
  %952 = vmatprep.subr.bf16.mxu0 0
  %953 = vmatpush1.bf16.msra.mxu0 0
  %954 = vmatprep.mubr.bf16.mxu0 0
  %955 = vmatmul.mubr.bf16.gmra.mrb[0].mxu0 %v387
  %v956 = vpop.f32.mrb[0].mxu0
  %v957 = vadd.f32 0.0, %v956
  %v958 = vpop.f32.mrb[0].mxu0
  %v959 = vpop.f32.mrb[0].mxu0
  %v960 = vpop.f32.mrb[0].mxu0
  %961 = vdwg.mxu0
  %962 = vst [vmem:[%s4 + $0x68] sm:$0xff] %v957
  %963 = vmatprep.subr.bf16.mxu0 0
  %964 = vmatpush1.bf16.msra.mxu0 %v380
  %965 = vmatprep.subr.bf16.mxu0 0
  %966 = vmatpush1.bf16.msra.mxu0 %v381
  %967 = vmatprep.subr.bf16.mxu0 0
  %968 = vmatpush1.bf16.msra.mxu0 0
  %969 = vmatprep.subr.bf16.mxu0 0
  %970 = vmatpush1.bf16.msra.mxu0 0
  %971 = vmatprep.subr.bf16.mxu0 0
  %972 = vmatpush1.bf16.msra.mxu0 0
  %973 = vmatprep.subr.bf16.mxu0 0
  %974 = vmatpush1.bf16.msra.mxu0 0
  %975 = vmatprep.subr.bf16.mxu0 0
  %976 = vmatpush1.bf16.msra.mxu0 0
  %977 = vmatprep.subr.bf16.mxu0 0
  %978 = vmatpush1.bf16.msra.mxu0 0
  %979 = vmatprep.subr.bf16.mxu0 0
  %980 = vmatpush1.bf16.msra.mxu0 0
  %981 = vmatprep.subr.bf16.mxu0 0
  %982 = vmatpush1.bf16.msra.mxu0 0
  %983 = vmatprep.subr.bf16.mxu0 0
  %984 = vmatpush1.bf16.msra.mxu0 0
  %985 = vmatprep.subr.bf16.mxu0 0
  %986 = vmatpush1.bf16.msra.mxu0 0
  %987 = vmatprep.subr.bf16.mxu0 0
  %988 = vmatpush1.bf16.msra.mxu0 0
  %989 = vmatprep.subr.bf16.mxu0 0
  %990 = vmatpush1.bf16.msra.mxu0 0
  %991 = vmatprep.subr.bf16.mxu0 0
  %992 = vmatpush1.bf16.msra.mxu0 0
  %993 = vmatprep.subr.bf16.mxu0 0
  %994 = vmatpush1.bf16.msra.mxu0 0
  %995 = vmatprep.mubr.bf16.mxu0 0
  %996 = vmatmul.mubr.bf16.gmra.mrb[0].mxu0 %v387
  %v997 = vpop.f32.mrb[0].mxu0
  %v998 = vadd.f32 0.0, %v997
  %v999 = vpop.f32.mrb[0].mxu0
  %v1000 = vpop.f32.mrb[0].mxu0
  %v1001 = vpop.f32.mrb[0].mxu0
  %1002 = vdwg.mxu0
  %1003 = vst [vmem:[%s4 + $0x70] sm:$0xff] %v998
  %1004 = vmatprep.subr.bf16.mxu0 0
  %1005 = vmatpush1.bf16.msra.mxu0 %v382
  %1006 = vmatprep.subr.bf16.mxu0 0
  %1007 = vmatpush1.bf16.msra.mxu0 %v383
  %1008 = vmatprep.subr.bf16.mxu0 0
  %1009 = vmatpush1.bf16.msra.mxu0 0
  %1010 = vmatprep.subr.bf16.mxu0 0
  %1011 = vmatpush1.bf16.msra.mxu0 0
  %1012 = vmatprep.subr.bf16.mxu0 0
  %1013 = vmatpush1.bf16.msra.mxu0 0
  %1014 = vmatprep.subr.bf16.mxu0 0
  %1015 = vmatpush1.bf16.msra.mxu0 0
  %1016 = vmatprep.subr.bf16.mxu0 0
  %1017 = vmatpush1.bf16.msra.mxu0 0
  %1018 = vmatprep.subr.bf16.mxu0 0
  %1019 = vmatpush1.bf16.msra.mxu0 0
  %1020 = vmatprep.subr.bf16.mxu0 0
  %1021 = vmatpush1.bf16.msra.mxu0 0
  %1022 = vmatprep.subr.bf16.mxu0 0
  %1023 = vmatpush1.bf16.msra.mxu0 0
  %1024 = vmatprep.subr.bf16.mxu0 0
  %1025 = vmatpush1.bf16.msra.mxu0 0
  %1026 = vmatprep.subr.bf16.mxu0 0
  %1027 = vmatpush1.bf16.msra.mxu0 0
  %1028 = vmatprep.subr.bf16.mxu0 0
  %1029 = vmatpush1.bf16.msra.mxu0 0
  %1030 = vmatprep.subr.bf16.mxu0 0
  %1031 = vmatpush1.bf16.msra.mxu0 0
  %1032 = vmatprep.subr.bf16.mxu0 0
  %1033 = vmatpush1.bf16.msra.mxu0 0
  %1034 = vmatprep.subr.bf16.mxu0 0
  %1035 = vmatpush1.bf16.msra.mxu0 0
  %1036 = vmatprep.mubr.bf16.mxu0 0
  %1037 = vmatmul.mubr.bf16.gmra.mrb[0].mxu0 %v387
  %v1038 = vpop.f32.mrb[0].mxu0
  %v1039 = vadd.f32 0.0, %v1038
  %v1040 = vpop.f32.mrb[0].mxu0
  %v1041 = vpop.f32.mrb[0].mxu0
  %v1042 = vpop.f32.mrb[0].mxu0
  %1043 = vdwg.mxu0
  %1044 = vst [vmem:[%s4 + $0x78] sm:$0xff] %v1039
  // Predicated region
  $region18: #{downblock2d_forward.3} parent=0 // pred_check
    _
  $region19: #{downblock2d_forward.3} parent=0 // pred_check_branch
    %1046 = sbr.rel (0) target = $region21
  $region20: #{downblock2d_forward.3} parent=0 // pred_region
    _
  $region21: #{downblock2d_forward.3} parent=0 // pred_fallthru
    _
  // Predicated region
  $region22: #{downblock2d_forward.3} parent=0 // pred_check
    _
  $region23: #{downblock2d_forward.3} parent=0 // pred_check_branch
    %1048 = sbr.rel (0) target = $region25
  $region24: #{downblock2d_forward.3} parent=0 // pred_region
    _
  $region25: #{downblock2d_forward.3} parent=0 // pred_fallthru
    _

// kernel: downblock2d_forward.2
$region0: #{downblock2d_forward.2}
  #allocation0 [shape = 'u32[]', space=smem, size = 0x4, offset = 0x4, fixed_abs, tag = 'smem constant byte address 0x4 - core index']
  #allocation1 [shape = 'u32[144,128]{1,0:T(1,128)}', space=vmem, size = 0x12000, scoped, tag = 'internal scratch']
  %s0 = inlined_call_operand.vmem [shape: bf16[2,288,12], index: 0, kind: input, shape index: {}]
  %s1 = inlined_call_operand.vmem [shape: bf16[3,12,128], index: 1, kind: input, shape index: {}]
  %s2 = inlined_call_operand.vmem [shape: bf16[512,128], index: 2, kind: output, shape index: {0}]
  %s3 = inlined_call_operand.vmem [shape: f32[2,2,128], index: 3, kind: output, shape index: {1}]
  %4 = xla_tuple %s2, %s3
  %s5 = sld [smem:[#allocation0]]
  $region49: #{downblock2d_forward.2} parent=0
    _
  %s7 = ssub.s32 1, %s5
  %s8 = scalar_select 0, %s7, %s5
  loop: start=0, step=1, limit=4
  $region2: #{downblock2d_forward.2} parent=0 // loop_pre_header
    _
  $region3: #{downblock2d_forward.2} parent=0 // loop_header
    %s10 = sphi 0, %s14
    %p11 = scmp.ge.s32.totalorder %s10, 4
    %s17 = sphi 0, %s29
    %s18 = sphi 0, %s25
    %s19 = sphi 0, %s17
    %s20 = sphi 0, %s18
    %s21 = sphi 0, %s19
    %s22 = sphi 0, %s20
    %s32 = sphi 0, %s34
    %s35 = sphi 0, %s32
    %s36 = sphi 0, %s35
    %s52 = sphi 0, %s36
    %s56 = sphi 0, %s56
    %s58 = sphi 0, %s56
    %s59 = sphi 0, %s58
    %s73 = sphi 0, %s59
    %s81 = sphi 0, %s83
    %s84 = sphi 0, %s81
    %s85 = sphi 0, %s84
    %s101 = sphi 0, %s85
    %s109 = sphi 0, %s111
    %s112 = sphi 0, %s109
    %s113 = sphi 0, %s112
    %s129 = sphi 0, %s113
  $region4: #{downblock2d_forward.2} parent=0 // loop_header_branch
    %13 = sbr.rel (%p11) target = $region8
  $region5: #{downblock2d_forward.2} parent=0 // loop_body
    %s15 = ssub.s32 %s10, 1
    %s16 = ssub.s32 %s10, 2
    %s23 = sadd.s32 1, %s18
    %p24 = scmp.ge.s32.totalorder %s23, 1
    %s25 = scalar_select %p24, 0, %s23
    %s26 = sadd.s32 1, %s17
    %s27 = scalar_select %p24, %s26, %s17
    %p28 = scmp.ge.s32.totalorder %s27, 2
    %s29 = scalar_select %p28, 0, %s27
    %s30 = ssub.s32 %s17, %s29
    %p31 = scmp.eq.s32.totalorder %s30, 0
    %s33 = sadd.s32 %s32, 1
    %s34 = scalar_select %p31, %s32, %s33
    %p37 = pneg %p31
    %p38 = scmp.eq.s32.totalorder %s10, 1
    %p39 = por %p37, %p38
    %p40 = scmp.ne.s32.totalorder %s32, %s35
    %p41 = scmp.eq.s32.totalorder %s10, 0
    %p42 = por %p40, %p41
    %p43 = scmp.ne.s32.totalorder %s32, %s35
    %p44 = scmp.eq.s32.totalorder %s15, 1
    %p45 = por %p43, %p44
    %p46 = scmp.ne.s32.totalorder %s35, %s36
    %p47 = scmp.eq.s32.totalorder %s15, 0
    %p48 = por %p46, %p47
    %p49 = scmp.ne.s32.totalorder %s35, %s36
    %p50 = scmp.eq.s32.totalorder %s16, 1
    %p51 = por %p49, %p50
    %p53 = scmp.ne.s32.totalorder %s36, %s52
    %p54 = scmp.eq.s32.totalorder %s16, 0
    %p55 = por %p53, %p54
    %s57 = sadd.s32 %s56, 1
    %p60 = scmp.eq.s32.totalorder %s10, 1
    %p61 = scmp.ne.s32.totalorder %s56, %s58
    %p62 = scmp.eq.s32.totalorder %s10, 0
    %p63 = por %p61, %p62
    %p64 = scmp.ne.s32.totalorder %s56, %s58
    %p65 = scmp.eq.s32.totalorder %s15, 1
    %p66 = por %p64, %p65
    %p67 = scmp.ne.s32.totalorder %s58, %s59
    %p68 = scmp.eq.s32.totalorder %s15, 0
    %p69 = por %p67, %p68
    %p70 = scmp.ne.s32.totalorder %s58, %s59
    %p71 = scmp.eq.s32.totalorder %s16, 1
    %p72 = por %p70, %p71
    %p74 = scmp.ne.s32.totalorder %s59, %s73
    %p75 = scmp.eq.s32.totalorder %s16, 0
    %p76 = por %p74, %p75
    %s77 = sadd.s32 %s17, %s18
    %s78 = sadd.s32 %s29, %s25
    %s79 = ssub.s32 %s77, %s78
    %p80 = scmp.eq.s32.totalorder %s79, 0
    %s82 = sadd.s32 %s81, 1
    %s83 = scalar_select %p80, %s81, %s82
    %p86 = pneg %p80
    %p87 = scmp.eq.s32.totalorder %s10, 1
    %p88 = por %p86, %p87
    %p89 = scmp.ne.s32.totalorder %s81, %s84
    %p90 = scmp.eq.s32.totalorder %s10, 0
    %p91 = por %p89, %p90
    %p92 = scmp.ne.s32.totalorder %s81, %s84
    %p93 = scmp.eq.s32.totalorder %s15, 1
    %p94 = por %p92, %p93
    %p95 = scmp.ne.s32.totalorder %s84, %s85
    %p96 = scmp.eq.s32.totalorder %s15, 0
    %p97 = por %p95, %p96
    %p98 = scmp.ne.s32.totalorder %s84, %s85
    %p99 = scmp.eq.s32.totalorder %s16, 1
    %p100 = por %p98, %p99
    %p102 = scmp.ne.s32.totalorder %s85, %s101
    %p103 = scmp.eq.s32.totalorder %s16, 0
    %p104 = por %p102, %p103
    %s105 = sadd.s32 %s17, %s18
    %s106 = sadd.s32 %s29, %s25
    %s107 = ssub.s32 %s105, %s106
    %p108 = scmp.eq.s32.totalorder %s107, 0
    %s110 = sadd.s32 %s109, 1
    %s111 = scalar_select %p108, %s109, %s110
    %p114 = pneg %p108
    %p115 = scmp.eq.s32.totalorder %s10, 1
    %p116 = por %p114, %p115
    %p117 = scmp.ne.s32.totalorder %s109, %s112
    %p118 = scmp.eq.s32.totalorder %s10, 0
    %p119 = por %p117, %p118
    %p120 = scmp.ne.s32.totalorder %s109, %s112
    %p121 = scmp.eq.s32.totalorder %s15, 1
    %p122 = por %p120, %p121
    %p123 = scmp.ne.s32.totalorder %s112, %s113
    %p124 = scmp.eq.s32.totalorder %s15, 0
    %p125 = por %p123, %p124
    %p126 = scmp.ne.s32.totalorder %s112, %s113
    %p127 = scmp.eq.s32.totalorder %s16, 1
    %p128 = por %p126, %p127
    %p130 = scmp.ne.s32.totalorder %s113, %s129
    %p131 = scmp.eq.s32.totalorder %s16, 0
    %p132 = por %p130, %p131
    %p133 = scmp.le.s32.totalorder 1, %s10
    %p134 = scmp.lt.s32.totalorder %s10, 3
    %p135 = pnand %p133, %p134
    %p136 = pneg %p135
    // Predicated region
    $region9: #{downblock2d_forward.2} parent=5 // pred_check
      _
    $region10: #{downblock2d_forward.2} parent=5 // pred_check_branch
      %138 = sbr.rel (%p135) target = $region12
    $region11: #{downblock2d_forward.2} parent=5 // pred_region
      %s139 = ssub.s32 %s10, 1
      // Predicated region
      $region13: #{downblock2d_forward.2} parent=11 // pred_check
        %p140 = pneg %p69
      $region14: #{downblock2d_forward.2} parent=11 // pred_check_branch
        %142 = sbr.rel (%p140) target = $region16
      $region15: #{downblock2d_forward.2} parent=11 // pred_region
        _
      $region16: #{downblock2d_forward.2} parent=11 // pred_fallthru
        _
    $region12: #{downblock2d_forward.2} parent=5 // pred_fallthru
      _
    %p143 = scmp.lt.s32.totalorder %s10, 2
    // Predicated region
    $region17: #{downblock2d_forward.2} parent=5 // pred_check
      %p144 = pneg %p143
    $region18: #{downblock2d_forward.2} parent=5 // pred_check_branch
      %146 = sbr.rel (%p144) target = $region20
    $region19: #{downblock2d_forward.2} parent=5 // pred_region
      // Predicated region
      $region21: #{downblock2d_forward.2} parent=19 // pred_check
        %p147 = pneg %p42
      $region22: #{downblock2d_forward.2} parent=19 // pred_check_branch
        %149 = sbr.rel (%p147) target = $region24
      $region23: #{downblock2d_forward.2} parent=19 // pred_region
        %p150 = scmp.lt.s32.totalorder %s17, 1
        %s151 = scalar_select %p150, %s17, 1
        %s152 = smul.addr %s151, 36
        %s153 = smul.addr %s152, 4
        %s154 = scalar_lea.vmem %s0, %s153
      $region24: #{downblock2d_forward.2} parent=19 // pred_fallthru
        _
    $region20: #{downblock2d_forward.2} parent=5 // pred_fallthru
      _
    %p155 = scmp.le.s32.totalorder 1, %s10
    %p156 = scmp.lt.s32.totalorder %s10, 3
    %p157 = pnand %p155, %p156
    %p158 = pneg %p157
    // Predicated region
    $region25: #{downblock2d_forward.2} parent=5 // pred_check
      _
    $region26: #{downblock2d_forward.2} parent=5 // pred_check_branch
      %160 = sbr.rel (%p157) target = $region28
    $region27: #{downblock2d_forward.2} parent=5 // pred_region
      %s161 = ssub.s32 %s10, 1
      %p162 = scmp.lt.s32.totalorder %s19, 1
      %s163 = scalar_select %p162, %s19, 1
      %s164 = smul.addr %s163, 36
      %s165 = smul.addr %s164, 4
      %s166 = scalar_lea.vmem %s0, %s165
      %p167 = pneg %p48
      %p168 = pneg %p45
      %p169 = pneg %p69
      %p170 = pneg %p66
      %p171 = pneg %p97
      %p172 = pneg %p94
      %s173 = sadd.s32 %s19, %s20
      %s174 = smul.u32 32, %s173
      %p175 = scmp.lt.s32.totalorder %s174, 63
      %s176 = scalar_select %p175, %s174, 63
      %s177 = smul.addr %s176, 4
      %s178 = scalar_lea.vmem %s2, %s177
      %p179 = pneg %p125
      %p180 = pneg %p122
      %s181 = sadd.s32 %s19, %s20
      %p182 = scmp.lt.s32.totalorder %s181, 1
      %s183 = scalar_select %p182, %s181, 1
      %s184 = smul.addr %s183, 2
      %s185 = scalar_lea.vmem %s3, %s184
      %p186 = scmp.lt.s32.totalorder %s19, 1
      %s187 = scalar_select %p186, %s19, 1
      %s188 = smul.addr %s187, 36
      %s189 = smul.addr %s188, 4
      %s190 = scalar_lea.vmem %s0, %s189
      %s191 = sadd.s32 %s19, %s20
      %s192 = smul.u32 32, %s191
      %p193 = scmp.lt.s32.totalorder %s192, 63
      %s194 = scalar_select %p193, %s192, 63
      %s195 = smul.addr %s194, 4
      %s196 = scalar_lea.vmem %s2, %s195
      %s197 = sadd.s32 %s19, %s20
      %s198 = smul.u32 32, %s197
      %s199 = sadd.s32 %s19, %s20
      %p200 = scmp.lt.s32.totalorder %s199, 1
      %s201 = scalar_select %p200, %s199, 1
      %s202 = smul.addr %s201, 2
      %s203 = scalar_lea.vmem %s3, %s202
      %s204 = sadd.s32 %s19, %s20
      %s206 = smul.u32 %s20, 256
      %s207 = sshra.s32 %s206, 3
      %s208 = sand.u32 %s206, 7
      %s209 = smul.addr %s207, 4
      %s210 = scalar_lea.vmem %s190, %s209
      %v211 = vld [vmem:[%s210] sm:$0xf]
      %v212 = vld [vmem:[%s210 + $0x4] sm:$0xf]
      %v213 = vld [vmem:[%s210 + $0x8] sm:$0xf]
      %v214 = vld [vmem:[%s210 + $0xc] sm:$0xf]
      %v215 = vld [vmem:[%s210 + $0x10] sm:$0xf]
      %v216 = vld [vmem:[%s210 + $0x14] sm:$0xf]
      %v217 = vld [vmem:[%s210 + $0x18] sm:$0xf]
      %v218 = vld [vmem:[%s210 + $0x1c] sm:$0xf]
      %v219 = vld [vmem:[%s210 + $0x20] sm:$0xf]
      %v220 = vld [vmem:[%s210 + $0x24] sm:$0xf]
      %v221 = vld [vmem:[%s210 + $0x28] sm:$0xf]
      %v222 = vld [vmem:[%s210 + $0x2c] sm:$0xf]
      %v223 = vld [vmem:[%s210 + $0x30] sm:$0xf]
      %v224 = vld [vmem:[%s210 + $0x34] sm:$0xf]
      %v225 = vld [vmem:[%s210 + $0x38] sm:$0xf]
      %v226 = vld [vmem:[%s210 + $0x3c] sm:$0xf]
      %v227 = vld [vmem:[%s210 + $0x40] sm:$0xf]
      %v228 = vld [vmem:[%s210 + $0x44] sm:$0xf]
      %v229 = vld [vmem:[%s210 + $0x48] sm:$0xf]
      %v230 = vld [vmem:[%s210 + $0x4c] sm:$0xf]
      %v231 = vld [vmem:[%s210 + $0x50] sm:$0xf]
      %v232 = vld [vmem:[%s210 + $0x54] sm:$0xf]
      %v233 = vld [vmem:[%s210 + $0x58] sm:$0xf]
      %v234 = vld [vmem:[%s210 + $0x5c] sm:$0xf]
      %v235 = vld [vmem:[%s210 + $0x60] sm:$0xf]
      %v236 = vld [vmem:[%s210 + $0x64] sm:$0xf]
      %v237 = vld [vmem:[%s210 + $0x68] sm:$0xf]
      %v238 = vld [vmem:[%s210 + $0x6c] sm:$0xf]
      %v239 = vld [vmem:[%s210 + $0x70] sm:$0xf]
      %v240 = vld [vmem:[%s210 + $0x74] sm:$0xf]
      %v241 = vld [vmem:[%s210 + $0x78] sm:$0xf]
      %v242 = vld [vmem:[%s210 + $0x7c] sm:$0xf]
      %v243 = vld [vmem:[%s1] sm:$0xf]
      %v244 = vld [vmem:[%s1 + $0x4] sm:$0x3]
      %s245 = sadd.s32 %s206, 16
      %s246 = sshra.s32 %s245, 3
      %s247 = sand.u32 %s245, 7
      %s248 = smul.addr %s246, 4
      %s249 = scalar_lea.vmem %s190, %s248
      %v250 = vld [vmem:[%s249] sm:$0xf]
      %v251 = vld [vmem:[%s249 + $0x4] sm:$0xf]
      %v252 = vld [vmem:[%s249 + $0x8] sm:$0xf]
      %v253 = vld [vmem:[%s249 + $0xc] sm:$0xf]
      %v254 = vld [vmem:[%s249 + $0x10] sm:$0xf]
      %v255 = vld [vmem:[%s249 + $0x14] sm:$0xf]
      %v256 = vld [vmem:[%s249 + $0x18] sm:$0xf]
      %v257 = vld [vmem:[%s249 + $0x1c] sm:$0xf]
      %v258 = vld [vmem:[%s249 + $0x20] sm:$0xf]
      %v259 = vld [vmem:[%s249 + $0x24] sm:$0xf]
      %v260 = vld [vmem:[%s249 + $0x28] sm:$0xf]
      %v261 = vld [vmem:[%s249 + $0x2c] sm:$0xf]
      %v262 = vld [vmem:[%s249 + $0x30] sm:$0xf]
      %v263 = vld [vmem:[%s249 + $0x34] sm:$0xf]
      %v264 = vld [vmem:[%s249 + $0x38] sm:$0xf]
      %v265 = vld [vmem:[%s249 + $0x3c] sm:$0xf]
      %v266 = vld [vmem:[%s249 + $0x40] sm:$0xf]
      %v267 = vld [vmem:[%s249 + $0x44] sm:$0xf]
      %v268 = vld [vmem:[%s249 + $0x48] sm:$0xf]
      %v269 = vld [vmem:[%s249 + $0x4c] sm:$0xf]
      %v270 = vld [vmem:[%s249 + $0x50] sm:$0xf]
      %v271 = vld [vmem:[%s249 + $0x54] sm:$0xf]
      %v272 = vld [vmem:[%s249 + $0x58] sm:$0xf]
      %v273 = vld [vmem:[%s249 + $0x5c] sm:$0xf]
      %v274 = vld [vmem:[%s249 + $0x60] sm:$0xf]
      %v275 = vld [vmem:[%s249 + $0x64] sm:$0xf]
      %v276 = vld [vmem:[%s249 + $0x68] sm:$0xf]
      %v277 = vld [vmem:[%s249 + $0x6c] sm:$0xf]
      %v278 = vld [vmem:[%s249 + $0x70] sm:$0xf]
      %v279 = vld [vmem:[%s249 + $0x74] sm:$0xf]
      %v280 = vld [vmem:[%s249 + $0x78] sm:$0xf]
      %v281 = vld [vmem:[%s249 + $0x7c] sm:$0xf]
      %s282 = scalar_lea.vmem %s1, 8
      %v283 = vld [vmem:[%s282] sm:$0xf]
      %v284 = vld [vmem:[%s282 + $0x4] sm:$0x3]
      %v317 = vunpack.c.l.b16 %v250
      %v318 = vunpack.c.l.b16 %v251
      %v319 = vunpack.c.l.b16 %v252
      %v320 = vunpack.c.l.b16 %v253
      %v321 = vunpack.c.l.b16 %v254
      %v322 = vunpack.c.l.b16 %v255
      %v323 = vunpack.c.l.b16 %v256
      %v324 = vunpack.c.l.b16 %v257
      %v325 = vunpack.c.l.b16 %v258
      %v326 = vunpack.c.l.b16 %v259
      %v327 = vunpack.c.l.b16 %v260
      %v328 = vunpack.c.l.b16 %v261
      %v329 = vunpack.c.l.b16 %v262
      %v330 = vunpack.c.l.b16 %v263
      %v331 = vunpack.c.l.b16 %v264
      %v332 = vunpack.c.l.b16 %v265
      %v333 = vunpack.c.l.b16 %v266
      %v334 = vunpack.c.l.b16 %v267
      %v335 = vunpack.c.l.b16 %v268
      %v336 = vunpack.c.l.b16 %v269
      %v337 = vunpack.c.l.b16 %v270
      %v338 = vunpack.c.l.b16 %v271
      %v339 = vunpack.c.l.b16 %v272
      %v340 = vunpack.c.l.b16 %v273
      %v341 = vunpack.c.l.b16 %v274
      %v342 = vunpack.c.l.b16 %v275
      %v343 = vunpack.c.l.b16 %v276
      %v344 = vunpack.c.l.b16 %v277
      %v345 = vunpack.c.l.b16 %v278
      %v346 = vunpack.c.l.b16 %v279
      %v347 = vunpack.c.l.b16 %v280
      %v348 = vunpack.c.l.b16 %v281
      %v349 = vpack.c.b16 %v318, %v317
      %v350 = vpack.c.b16 %v320, %v319
      %v351 = vpack.c.b16 %v322, %v321
      %v352 = vpack.c.b16 %v324, %v323
      %v353 = vpack.c.b16 %v326, %v325
      %v354 = vpack.c.b16 %v328, %v327
      %v355 = vpack.c.b16 %v330, %v329
      %v356 = vpack.c.b16 %v332, %v331
      %v357 = vpack.c.b16 %v334, %v333
      %v358 = vpack.c.b16 %v336, %v335
      %v359 = vpack.c.b16 %v338, %v337
      %v360 = vpack.c.b16 %v340, %v339
      %v361 = vpack.c.b16 %v342, %v341
      %v362 = vpack.c.b16 %v344, %v343
      %v363 = vpack.c.b16 %v346, %v345
      %v364 = vpack.c.b16 %v348, %v347
      %v367 = vunpack.c.l.b16 %v283
      %v368 = vunpack.c.l.b16 %v284
      %v369 = vpack.c.b16 %v368, %v367
      %vm370 = vcmask 97280
      %v372 = vsel %vm370, %v349, 0
      %v375 = vsel %vm370, %v350, 0
      %v378 = vsel %vm370, %v351, 0
      %v381 = vsel %vm370, %v352, 0
      %v384 = vsel %vm370, %v353, 0
      %v387 = vsel %vm370, %v354, 0
      %v390 = vsel %vm370, %v355, 0
      %v393 = vsel %vm370, %v356, 0
      %v396 = vsel %vm370, %v357, 0
      %v399 = vsel %vm370, %v358, 0
      %v402 = vsel %vm370, %v359, 0
      %v405 = vsel %vm370, %v360, 0
      %v408 = vsel %vm370, %v361, 0
      %v411 = vsel %vm370, %v362, 0
      %v414 = vsel %vm370, %v363, 0
      %v417 = vsel %vm370, %v364, 0
      %vm419 = vcmask 1045504
      %v421 = vsel %vm419, %v369, 0
      %423 = vmatprep.subr.bf16.mxu0 0
      %424 = vmatpush1.bf16.msra.mxu0 %v421
      %425 = vmatprep.subr.bf16.mxu0 0
      %426 = vmatpush1.bf16.msra.mxu0 0
      %427 = vmatprep.subr.bf16.mxu0 0
      %428 = vmatpush1.bf16.msra.mxu0 0
      %429 = vmatprep.subr.bf16.mxu0 0
      %430 = vmatpush1.bf16.msra.mxu0 0
      %431 = vmatprep.subr.bf16.mxu0 0
      %432 = vmatpush1.bf16.msra.mxu0 0
      %433 = vmatprep.subr.bf16.mxu0 0
      %434 = vmatpush1.bf16.msra.mxu0 0
      %435 = vmatprep.subr.bf16.mxu0 0
      %436 = vmatpush1.bf16.msra.mxu0 0
      %437 = vmatprep.subr.bf16.mxu0 0
      %438 = vmatpush1.bf16.msra.mxu0 0
      %439 = vmatprep.subr.bf16.mxu0 0
      %440 = vmatpush1.bf16.msra.mxu0 0
      %441 = vmatprep.subr.bf16.mxu0 0
      %442 = vmatpush1.bf16.msra.mxu0 0
      %443 = vmatprep.subr.bf16.mxu0 0
      %444 = vmatpush1.bf16.msra.mxu0 0
      %445 = vmatprep.subr.bf16.mxu0 0
      %446 = vmatpush1.bf16.msra.mxu0 0
      %447 = vmatprep.subr.bf16.mxu0 0
      %448 = vmatpush1.bf16.msra.mxu0 0
      %449 = vmatprep.subr.bf16.mxu0 0
      %450 = vmatpush1.bf16.msra.mxu0 0
      %451 = vmatprep.subr.bf16.mxu0 0
      %452 = vmatpush1.bf16.msra.mxu0 0
      %453 = vmatprep.subr.bf16.mxu0 0
      %454 = vmatpush1.bf16.msra.mxu0 0
      %455 = vmatprep.mubr.bf16.mxu0 0
      %456 = vmatmul.mubr.bf16.gmra.mrb[0].mxu0 %v372
      %v457 = vpop.f32.mrb[0].mxu0
      %v458 = vadd.f32 0.0, %v457
      %v459 = vpop.f32.mrb[0].mxu0
      %v460 = vpop.f32.mrb[0].mxu0
      %v461 = vadd.f32 0.0, %v460
      %v462 = vpop.f32.mrb[0].mxu0
      %463 = vmatprep.mubr.bf16.mxu0 0
      %464 = vmatmul.mubr.bf16.gmra.mrb[0].mxu0 %v375
      %v465 = vpop.f32.mrb[0].mxu0
      %v466 = vadd.f32 0.0, %v465
      %v467 = vpop.f32.mrb[0].mxu0
      %v468 = vpop.f32.mrb[0].mxu0
      %v469 = vadd.f32 0.0, %v468
      %v470 = vpop.f32.mrb[0].mxu0
      %471 = vmatprep.mubr.bf16.mxu0 0
      %472 = vmatmul.mubr.bf16.gmra.mrb[0].mxu0 %v378
      %v473 = vpop.f32.mrb[0].mxu0
      %v474 = vadd.f32 0.0, %v473
      %v475 = vpop.f32.mrb[0].mxu0
      %v476 = vpop.f32.mrb[0].mxu0
      %v477 = vadd.f32 0.0, %v476
      %v478 = vpop.f32.mrb[0].mxu0
      %479 = vmatprep.mubr.bf16.mxu0 0
      %480 = vmatmul.mubr.bf16.gmra.mrb[0].mxu0 %v381
      %v481 = vpop.f32.mrb[0].mxu0
      %v482 = vadd.f32 0.0, %v481
      %v483 = vpop.f32.mrb[0].mxu0
      %v484 = vpop.f32.mrb[0].mxu0
      %v485 = vadd.f32 0.0, %v484
      %v486 = vpop.f32.mrb[0].mxu0
      %487 = vmatprep.mubr.bf16.mxu0 0
      %488 = vmatmul.mubr.bf16.gmra.mrb[0].mxu0 %v384
      %v489 = vpop.f32.mrb[0].mxu0
      %v490 = vadd.f32 0.0, %v489
      %v491 = vpop.f32.mrb[0].mxu0
      %v492 = vpop.f32.mrb[0].mxu0
      %v493 = vadd.f32 0.0, %v492
      %v494 = vpop.f32.mrb[0].mxu0
      %495 = vmatprep.mubr.bf16.mxu0 0
      %496 = vmatmul.mubr.bf16.gmra.mrb[0].mxu0 %v387
      %v497 = vpop.f32.mrb[0].mxu0
      %v498 = vadd.f32 0.0, %v497
      %v499 = vpop.f32.mrb[0].mxu0
      %v500 = vpop.f32.mrb[0].mxu0
      %v501 = vadd.f32 0.0, %v500
      %v502 = vpop.f32.mrb[0].mxu0
      %503 = vmatprep.mubr.bf16.mxu0 0
      %504 = vmatmul.mubr.bf16.gmra.mrb[0].mxu0 %v390
      %v505 = vpop.f32.mrb[0].mxu0
      %v506 = vadd.f32 0.0, %v505
      %v507 = vpop.f32.mrb[0].mxu0
      %v508 = vpop.f32.mrb[0].mxu0
      %v509 = vadd.f32 0.0, %v508
      %v510 = vpop.f32.mrb[0].mxu0
      %511 = vmatprep.mubr.bf16.mxu0 0
      %512 = vmatmul.mubr.bf16.gmra.mrb[0].mxu0 %v393
      %v513 = vpop.f32.mrb[0].mxu0
      %v514 = vadd.f32 0.0, %v513
      %v515 = vpop.f32.mrb[0].mxu0
      %v516 = vpop.f32.mrb[0].mxu0
      %v517 = vadd.f32 0.0, %v516
      %v518 = vpop.f32.mrb[0].mxu0
      %519 = vmatprep.mubr.bf16.mxu0 0
      %520 = vmatmul.mubr.bf16.gmra.mrb[0].mxu0 %v396
      %v521 = vpop.f32.mrb[0].mxu0
      %v522 = vadd.f32 0.0, %v521
      %v523 = vpop.f32.mrb[0].mxu0
      %v524 = vpop.f32.mrb[0].mxu0
      %v525 = vadd.f32 0.0, %v524
      %v526 = vpop.f32.mrb[0].mxu0
      %527 = vmatprep.mubr.bf16.mxu0 0
      %528 = vmatmul.mubr.bf16.gmra.mrb[0].mxu0 %v399
      %v529 = vpop.f32.mrb[0].mxu0
      %v530 = vadd.f32 0.0, %v529
      %v531 = vpop.f32.mrb[0].mxu0
      %v532 = vpop.f32.mrb[0].mxu0
      %v533 = vadd.f32 0.0, %v532
      %v534 = vpop.f32.mrb[0].mxu0
      %535 = vmatprep.mubr.bf16.mxu0 0
      %536 = vmatmul.mubr.bf16.gmra.mrb[0].mxu0 %v402
      %v537 = vpop.f32.mrb[0].mxu0
      %v538 = vadd.f32 0.0, %v537
      %v539 = vpop.f32.mrb[0].mxu0
      %v540 = vpop.f32.mrb[0].mxu0
      %v541 = vadd.f32 0.0, %v540
      %v542 = vpop.f32.mrb[0].mxu0
      %543 = vmatprep.mubr.bf16.mxu0 0
      %544 = vmatmul.mubr.bf16.gmra.mrb[0].mxu0 %v405
      %v545 = vpop.f32.mrb[0].mxu0
      %v546 = vadd.f32 0.0, %v545
      %v547 = vpop.f32.mrb[0].mxu0
      %v548 = vpop.f32.mrb[0].mxu0
      %v549 = vadd.f32 0.0, %v548
      %v550 = vpop.f32.mrb[0].mxu0
      %551 = vmatprep.mubr.bf16.mxu0 0
      %552 = vmatmul.mubr.bf16.gmra.mrb[0].mxu0 %v408
      %v553 = vpop.f32.mrb[0].mxu0
      %v554 = vadd.f32 0.0, %v553
      %v555 = vpop.f32.mrb[0].mxu0
      %v556 = vpop.f32.mrb[0].mxu0
      %v557 = vadd.f32 0.0, %v556
      %v558 = vpop.f32.mrb[0].mxu0
      %559 = vmatprep.mubr.bf16.mxu0 0
      %560 = vmatmul.mubr.bf16.gmra.mrb[0].mxu0 %v411
      %v561 = vpop.f32.mrb[0].mxu0
      %v562 = vadd.f32 0.0, %v561
      %v563 = vpop.f32.mrb[0].mxu0
      %v564 = vpop.f32.mrb[0].mxu0
      %v565 = vadd.f32 0.0, %v564
      %v566 = vpop.f32.mrb[0].mxu0
      %567 = vmatprep.mubr.bf16.mxu0 0
      %568 = vmatmul.mubr.bf16.gmra.mrb[0].mxu0 %v414
      %v569 = vpop.f32.mrb[0].mxu0
      %v570 = vadd.f32 0.0, %v569
      %v571 = vpop.f32.mrb[0].mxu0
      %v572 = vpop.f32.mrb[0].mxu0
      %v573 = vadd.f32 0.0, %v572
      %v574 = vpop.f32.mrb[0].mxu0
      %575 = vmatprep.mubr.bf16.mxu0 0
      %576 = vmatmul.mubr.bf16.gmra.mrb[0].mxu0 %v417
      %v577 = vpop.f32.mrb[0].mxu0
      %v578 = vadd.f32 0.0, %v577
      %v579 = vpop.f32.mrb[0].mxu0
      %v580 = vpop.f32.mrb[0].mxu0
      %v581 = vadd.f32 0.0, %v580
      %v582 = vpop.f32.mrb[0].mxu0
      %583 = vdwg.mxu0
      %v616 = vunpack.c.l.b16 %v211
      %v617 = vunpack.c.l.b16 %v212
      %v618 = vunpack.c.l.b16 %v213
      %v619 = vunpack.c.l.b16 %v214
      %v620 = vunpack.c.l.b16 %v215
      %v621 = vunpack.c.l.b16 %v216
      %v622 = vunpack.c.l.b16 %v217
      %v623 = vunpack.c.l.b16 %v218
      %v624 = vunpack.c.l.b16 %v219
      %v625 = vunpack.c.l.b16 %v220
      %v626 = vunpack.c.l.b16 %v221
      %v627 = vunpack.c.l.b16 %v222
      %v628 = vunpack.c.l.b16 %v223
      %v629 = vunpack.c.l.b16 %v224
      %v630 = vunpack.c.l.b16 %v225
      %v631 = vunpack.c.l.b16 %v226
      %v632 = vunpack.c.l.b16 %v227
      %v633 = vunpack.c.l.b16 %v228
      %v634 = vunpack.c.l.b16 %v229
      %v635 = vunpack.c.l.b16 %v230
      %v636 = vunpack.c.l.b16 %v231
      %v637 = vunpack.c.l.b16 %v232
      %v638 = vunpack.c.l.b16 %v233
      %v639 = vunpack.c.l.b16 %v234
      %v640 = vunpack.c.l.b16 %v235
      %v641 = vunpack.c.l.b16 %v236
      %v642 = vunpack.c.l.b16 %v237
      %v643 = vunpack.c.l.b16 %v238
      %v644 = vunpack.c.l.b16 %v239
      %v645 = vunpack.c.l.b16 %v240
      %v646 = vunpack.c.l.b16 %v241
      %v647 = vunpack.c.l.b16 %v242
      %v648 = vpack.c.b16 %v617, %v616
      %v649 = vpack.c.b16 %v619, %v618
      %v650 = vpack.c.b16 %v621, %v620
      %v651 = vpack.c.b16 %v623, %v622
      %v652 = vpack.c.b16 %v625, %v624
      %v653 = vpack.c.b16 %v627, %v626
      %v654 = vpack.c.b16 %v629, %v628
      %v655 = vpack.c.b16 %v631, %v630
      %v656 = vpack.c.b16 %v633, %v632
      %v657 = vpack.c.b16 %v635, %v634
      %v658 = vpack.c.b16 %v637, %v636
      %v659 = vpack.c.b16 %v639, %v638
      %v660 = vpack.c.b16 %v641, %v640
      %v661 = vpack.c.b16 %v643, %v642
      %v662 = vpack.c.b16 %v645, %v644
      %v663 = vpack.c.b16 %v647, %v646
      %v666 = vunpack.c.l.b16 %v243
      %v667 = vunpack.c.l.b16 %v244
      %v668 = vpack.c.b16 %v667, %v666
      %v670 = vsel %vm370, %v648, 0
      %v673 = vsel %vm370, %v649, 0
      %v676 = vsel %vm370, %v650, 0
      %v679 = vsel %vm370, %v651, 0
      %v682 = vsel %vm370, %v652, 0
      %v685 = vsel %vm370, %v653, 0
      %v688 = vsel %vm370, %v654, 0
      %v691 = vsel %vm370, %v655, 0
      %v694 = vsel %vm370, %v656, 0
      %v697 = vsel %vm370, %v657, 0
      %v700 = vsel %vm370, %v658, 0
      %v703 = vsel %vm370, %v659, 0
      %v706 = vsel %vm370, %v660, 0
      %v709 = vsel %vm370, %v661, 0
      %v712 = vsel %vm370, %v662, 0
      %v715 = vsel %vm370, %v663, 0
      %v718 = vsel %vm419, %v668, 0
      %720 = vmatprep.subr.bf16.mxu0 0
      %721 = vmatpush1.bf16.msra.mxu0 %v718
      %722 = vmatprep.subr.bf16.mxu0 0
      %723 = vmatpush1.bf16.msra.mxu0 0
      %724 = vmatprep.subr.bf16.mxu0 0
      %725 = vmatpush1.bf16.msra.mxu0 0
      %726 = vmatprep.subr.bf16.mxu0 0
      %727 = vmatpush1.bf16.msra.mxu0 0
      %728 = vmatprep.subr.bf16.mxu0 0
      %729 = vmatpush1.bf16.msra.mxu0 0
      %730 = vmatprep.subr.bf16.mxu0 0
      %731 = vmatpush1.bf16.msra.mxu0 0
      %732 = vmatprep.subr.bf16.mxu0 0
      %733 = vmatpush1.bf16.msra.mxu0 0
      %734 = vmatprep.subr.bf16.mxu0 0
      %735 = vmatpush1.bf16.msra.mxu0 0
      %736 = vmatprep.subr.bf16.mxu0 0
      %737 = vmatpush1.bf16.msra.mxu0 0
      %738 = vmatprep.subr.bf16.mxu0 0
      %739 = vmatpush1.bf16.msra.mxu0 0
      %740 = vmatprep.subr.bf16.mxu0 0
      %741 = vmatpush1.bf16.msra.mxu0 0
      %742 = vmatprep.subr.bf16.mxu0 0
      %743 = vmatpush1.bf16.msra.mxu0 0
      %744 = vmatprep.subr.bf16.mxu0 0
      %745 = vmatpush1.bf16.msra.mxu0 0
      %746 = vmatprep.subr.bf16.mxu0 0
      %747 = vmatpush1.bf16.msra.mxu0 0
      %748 = vmatprep.subr.bf16.mxu0 0
      %749 = vmatpush1.bf16.msra.mxu0 0
      %750 = vmatprep.subr.bf16.mxu0 0
      %751 = vmatpush1.bf16.msra.mxu0 0
      %752 = vmatprep.mubr.bf16.mxu0 0
      %753 = vmatmul.mubr.bf16.gmra.mrb[0].mxu0 %v670
      %v754 = vpop.f32.mrb[0].mxu0
      %v755 = vadd.f32 %v458, %v754
      %v756 = vpop.f32.mrb[0].mxu0
      %v757 = vpop.f32.mrb[0].mxu0
      %v758 = vadd.f32 %v461, %v757
      %v759 = vpop.f32.mrb[0].mxu0
      %760 = vmatprep.mubr.bf16.mxu0 0
      %761 = vmatmul.mubr.bf16.gmra.mrb[0].mxu0 %v673
      %v762 = vpop.f32.mrb[0].mxu0
      %v763 = vadd.f32 %v466, %v762
      %v764 = vpop.f32.mrb[0].mxu0
      %v765 = vpop.f32.mrb[0].mxu0
      %v766 = vadd.f32 %v469, %v765
      %v767 = vpop.f32.mrb[0].mxu0
      %768 = vmatprep.mubr.bf16.mxu0 0
      %769 = vmatmul.mubr.bf16.gmra.mrb[0].mxu0 %v676
      %v770 = vpop.f32.mrb[0].mxu0
      %v771 = vadd.f32 %v474, %v770
      %v772 = vpop.f32.mrb[0].mxu0
      %v773 = vpop.f32.mrb[0].mxu0
      %v774 = vadd.f32 %v477, %v773
      %v775 = vpop.f32.mrb[0].mxu0
      %776 = vmatprep.mubr.bf16.mxu0 0
      %777 = vmatmul.mubr.bf16.gmra.mrb[0].mxu0 %v679
      %v778 = vpop.f32.mrb[0].mxu0
      %v779 = vadd.f32 %v482, %v778
      %v780 = vpop.f32.mrb[0].mxu0
      %v781 = vpop.f32.mrb[0].mxu0
      %v782 = vadd.f32 %v485, %v781
      %v783 = vpop.f32.mrb[0].mxu0
      %784 = vmatprep.mubr.bf16.mxu0 0
      %785 = vmatmul.mubr.bf16.gmra.mrb[0].mxu0 %v682
      %v786 = vpop.f32.mrb[0].mxu0
      %v787 = vadd.f32 %v490, %v786
      %v788 = vpop.f32.mrb[0].mxu0
      %v789 = vpop.f32.mrb[0].mxu0
      %v790 = vadd.f32 %v493, %v789
      %v791 = vpop.f32.mrb[0].mxu0
      %792 = vmatprep.mubr.bf16.mxu0 0
      %793 = vmatmul.mubr.bf16.gmra.mrb[0].mxu0 %v685
      %v794 = vpop.f32.mrb[0].mxu0
      %v795 = vadd.f32 %v498, %v794
      %v796 = vpop.f32.mrb[0].mxu0
      %v797 = vpop.f32.mrb[0].mxu0
      %v798 = vadd.f32 %v501, %v797
      %v799 = vpop.f32.mrb[0].mxu0
      %800 = vmatprep.mubr.bf16.mxu0 0
      %801 = vmatmul.mubr.bf16.gmra.mrb[0].mxu0 %v688
      %v802 = vpop.f32.mrb[0].mxu0
      %v803 = vadd.f32 %v506, %v802
      %v804 = vpop.f32.mrb[0].mxu0
      %v805 = vpop.f32.mrb[0].mxu0
      %v806 = vadd.f32 %v509, %v805
      %v807 = vpop.f32.mrb[0].mxu0
      %808 = vmatprep.mubr.bf16.mxu0 0
      %809 = vmatmul.mubr.bf16.gmra.mrb[0].mxu0 %v691
      %v810 = vpop.f32.mrb[0].mxu0
      %v811 = vadd.f32 %v514, %v810
      %v812 = vpop.f32.mrb[0].mxu0
      %v813 = vpop.f32.mrb[0].mxu0
      %v814 = vadd.f32 %v517, %v813
      %v815 = vpop.f32.mrb[0].mxu0
      %816 = vmatprep.mubr.bf16.mxu0 0
      %817 = vmatmul.mubr.bf16.gmra.mrb[0].mxu0 %v694
      %v818 = vpop.f32.mrb[0].mxu0
      %v819 = vadd.f32 %v522, %v818
      %v820 = vpop.f32.mrb[0].mxu0
      %v821 = vpop.f32.mrb[0].mxu0
      %v822 = vadd.f32 %v525, %v821
      %v823 = vpop.f32.mrb[0].mxu0
      %824 = vmatprep.mubr.bf16.mxu0 0
      %825 = vmatmul.mubr.bf16.gmra.mrb[0].mxu0 %v697
      %v826 = vpop.f32.mrb[0].mxu0
      %v827 = vadd.f32 %v530, %v826
      %v828 = vpop.f32.mrb[0].mxu0
      %v829 = vpop.f32.mrb[0].mxu0
      %v830 = vadd.f32 %v533, %v829
      %v831 = vpop.f32.mrb[0].mxu0
      %832 = vmatprep.mubr.bf16.mxu0 0
      %833 = vmatmul.mubr.bf16.gmra.mrb[0].mxu0 %v700
      %v834 = vpop.f32.mrb[0].mxu0
      %v835 = vadd.f32 %v538, %v834
      %v836 = vpop.f32.mrb[0].mxu0
      %v837 = vpop.f32.mrb[0].mxu0
      %v838 = vadd.f32 %v541, %v837
      %v839 = vpop.f32.mrb[0].mxu0
      %840 = vmatprep.mubr.bf16.mxu0 0
      %841 = vmatmul.mubr.bf16.gmra.mrb[0].mxu0 %v703
      %v842 = vpop.f32.mrb[0].mxu0
      %v843 = vadd.f32 %v546, %v842
      %v844 = vpop.f32.mrb[0].mxu0
      %v845 = vpop.f32.mrb[0].mxu0
      %v846 = vadd.f32 %v549, %v845
      %v847 = vpop.f32.mrb[0].mxu0
      %848 = vmatprep.mubr.bf16.mxu0 0
      %849 = vmatmul.mubr.bf16.gmra.mrb[0].mxu0 %v706
      %v850 = vpop.f32.mrb[0].mxu0
      %v851 = vadd.f32 %v554, %v850
      %v852 = vpop.f32.mrb[0].mxu0
      %v853 = vpop.f32.mrb[0].mxu0
      %v854 = vadd.f32 %v557, %v853
      %v855 = vpop.f32.mrb[0].mxu0
      %856 = vmatprep.mubr.bf16.mxu0 0
      %857 = vmatmul.mubr.bf16.gmra.mrb[0].mxu0 %v709
      %v858 = vpop.f32.mrb[0].mxu0
      %v859 = vadd.f32 %v562, %v858
      %v860 = vpop.f32.mrb[0].mxu0
      %v861 = vpop.f32.mrb[0].mxu0
      %v862 = vadd.f32 %v565, %v861
      %v863 = vpop.f32.mrb[0].mxu0
      %864 = vmatprep.mubr.bf16.mxu0 0
      %865 = vmatmul.mubr.bf16.gmra.mrb[0].mxu0 %v712
      %v866 = vpop.f32.mrb[0].mxu0
      %v867 = vadd.f32 %v570, %v866
      %v868 = vpop.f32.mrb[0].mxu0
      %v869 = vpop.f32.mrb[0].mxu0
      %v870 = vadd.f32 %v573, %v869
      %v871 = vpop.f32.mrb[0].mxu0
      %872 = vmatprep.mubr.bf16.mxu0 0
      %873 = vmatmul.mubr.bf16.gmra.mrb[0].mxu0 %v715
      %v874 = vpop.f32.mrb[0].mxu0
      %v875 = vadd.f32 %v578, %v874
      %v876 = vpop.f32.mrb[0].mxu0
      %v877 = vpop.f32.mrb[0].mxu0
      %v878 = vadd.f32 %v581, %v877
      %v879 = vpop.f32.mrb[0].mxu0
      %880 = vdwg.mxu0
      %s881 = sadd.s32 %s206, 32
      %s882 = sshra.s32 %s881, 3
      %s883 = sand.u32 %s881, 7
      %s884 = smul.addr %s882, 4
      %s885 = scalar_lea.vmem %s190, %s884
      %v886 = vld [vmem:[%s885] sm:$0xf]
      %v887 = vld [vmem:[%s885 + $0x4] sm:$0xf]
      %v888 = vld [vmem:[%s885 + $0x8] sm:$0xf]
      %v889 = vld [vmem:[%s885 + $0xc] sm:$0xf]
      %v890 = vld [vmem:[%s885 + $0x10] sm:$0xf]
      %v891 = vld [vmem:[%s885 + $0x14] sm:$0xf]
      %v892 = vld [vmem:[%s885 + $0x18] sm:$0xf]
      %v893 = vld [vmem:[%s885 + $0x1c] sm:$0xf]
      %v894 = vld [vmem:[%s885 + $0x20] sm:$0xf]
      %v895 = vld [vmem:[%s885 + $0x24] sm:$0xf]
      %v896 = vld [vmem:[%s885 + $0x28] sm:$0xf]
      %v897 = vld [vmem:[%s885 + $0x2c] sm:$0xf]
      %v898 = vld [vmem:[%s885 + $0x30] sm:$0xf]
      %v899 = vld [vmem:[%s885 + $0x34] sm:$0xf]
      %v900 = vld [vmem:[%s885 + $0x38] sm:$0xf]
      %v901 = vld [vmem:[%s885 + $0x3c] sm:$0xf]
      %v902 = vld [vmem:[%s885 + $0x40] sm:$0xf]
      %v903 = vld [vmem:[%s885 + $0x44] sm:$0xf]
      %v904 = vld [vmem:[%s885 + $0x48] sm:$0xf]
      %v905 = vld [vmem:[%s885 + $0x4c] sm:$0xf]
      %v906 = vld [vmem:[%s885 + $0x50] sm:$0xf]
      %v907 = vld [vmem:[%s885 + $0x54] sm:$0xf]
      %v908 = vld [vmem:[%s885 + $0x58] sm:$0xf]
      %v909 = vld [vmem:[%s885 + $0x5c] sm:$0xf]
      %v910 = vld [vmem:[%s885 + $0x60] sm:$0xf]
      %v911 = vld [vmem:[%s885 + $0x64] sm:$0xf]
      %v912 = vld [vmem:[%s885 + $0x68] sm:$0xf]
      %v913 = vld [vmem:[%s885 + $0x6c] sm:$0xf]
      %v914 = vld [vmem:[%s885 + $0x70] sm:$0xf]
      %v915 = vld [vmem:[%s885 + $0x74] sm:$0xf]
      %v916 = vld [vmem:[%s885 + $0x78] sm:$0xf]
      %v917 = vld [vmem:[%s885 + $0x7c] sm:$0xf]
      %s918 = scalar_lea.vmem %s1, 16
      %v919 = vld [vmem:[%s918] sm:$0xf]
      %v920 = vld [vmem:[%s918 + $0x4] sm:$0x3]
      %v953 = vunpack.c.l.b16 %v886
      %v954 = vunpack.c.l.b16 %v887
      %v955 = vunpack.c.l.b16 %v888
      %v956 = vunpack.c.l.b16 %v889
      %v957 = vunpack.c.l.b16 %v890
      %v958 = vunpack.c.l.b16 %v891
      %v959 = vunpack.c.l.b16 %v892
      %v960 = vunpack.c.l.b16 %v893
      %v961 = vunpack.c.l.b16 %v894
      %v962 = vunpack.c.l.b16 %v895
      %v963 = vunpack.c.l.b16 %v896
      %v964 = vunpack.c.l.b16 %v897
      %v965 = vunpack.c.l.b16 %v898
      %v966 = vunpack.c.l.b16 %v899
      %v967 = vunpack.c.l.b16 %v900
      %v968 = vunpack.c.l.b16 %v901
      %v969 = vunpack.c.l.b16 %v902
      %v970 = vunpack.c.l.b16 %v903
      %v971 = vunpack.c.l.b16 %v904
      %v972 = vunpack.c.l.b16 %v905
      %v973 = vunpack.c.l.b16 %v906
      %v974 = vunpack.c.l.b16 %v907
      %v975 = vunpack.c.l.b16 %v908
      %v976 = vunpack.c.l.b16 %v909
      %v977 = vunpack.c.l.b16 %v910
      %v978 = vunpack.c.l.b16 %v911
      %v979 = vunpack.c.l.b16 %v912
      %v980 = vunpack.c.l.b16 %v913
      %v981 = vunpack.c.l.b16 %v914
      %v982 = vunpack.c.l.b16 %v915
      %v983 = vunpack.c.l.b16 %v916
      %v984 = vunpack.c.l.b16 %v917
      %v985 = vpack.c.b16 %v954, %v953
      %v986 = vpack.c.b16 %v956, %v955
      %v987 = vpack.c.b16 %v958, %v957
      %v988 = vpack.c.b16 %v960, %v959
      %v989 = vpack.c.b16 %v962, %v961
      %v990 = vpack.c.b16 %v964, %v963
      %v991 = vpack.c.b16 %v966, %v965
      %v992 = vpack.c.b16 %v968, %v967
      %v993 = vpack.c.b16 %v970, %v969
      %v994 = vpack.c.b16 %v972, %v971
      %v995 = vpack.c.b16 %v974, %v973
      %v996 = vpack.c.b16 %v976, %v975
      %v997 = vpack.c.b16 %v978, %v977
      %v998 = vpack.c.b16 %v980, %v979
      %v999 = vpack.c.b16 %v982, %v981
      %v1000 = vpack.c.b16 %v984, %v983
      %v1003 = vunpack.c.l.b16 %v919
      %v1004 = vunpack.c.l.b16 %v920
      %v1005 = vpack.c.b16 %v1004, %v1003
      %v1007 = vsel %vm370, %v985, 0
      %v1010 = vsel %vm370, %v986, 0
      %v1013 = vsel %vm370, %v987, 0
      %v1016 = vsel %vm370, %v988, 0
      %v1019 = vsel %vm370, %v989, 0
      %v1022 = vsel %vm370, %v990, 0
      %v1025 = vsel %vm370, %v991, 0
      %v1028 = vsel %vm370, %v992, 0
      %v1031 = vsel %vm370, %v993, 0
      %v1034 = vsel %vm370, %v994, 0
      %v1037 = vsel %vm370, %v995, 0
      %v1040 = vsel %vm370, %v996, 0
      %v1043 = vsel %vm370, %v997, 0
      %v1046 = vsel %vm370, %v998, 0
      %v1049 = vsel %vm370, %v999, 0
      %v1052 = vsel %vm370, %v1000, 0
      %v1055 = vsel %vm419, %v1005, 0
      %1057 = vmatprep.subr.bf16.mxu0 0
      %1058 = vmatpush1.bf16.msra.mxu0 %v1055
      %1059 = vmatprep.subr.bf16.mxu0 0
      %1060 = vmatpush1.bf16.msra.mxu0 0
      %1061 = vmatprep.subr.bf16.mxu0 0
      %1062 = vmatpush1.bf16.msra.mxu0 0
      %1063 = vmatprep.subr.bf16.mxu0 0
      %1064 = vmatpush1.bf16.msra.mxu0 0
      %1065 = vmatprep.subr.bf16.mxu0 0
      %1066 = vmatpush1.bf16.msra.mxu0 0
      %1067 = vmatprep.subr.bf16.mxu0 0
      %1068 = vmatpush1.bf16.msra.mxu0 0
      %1069 = vmatprep.subr.bf16.mxu0 0
      %1070 = vmatpush1.bf16.msra.mxu0 0
      %1071 = vmatprep.subr.bf16.mxu0 0
      %1072 = vmatpush1.bf16.msra.mxu0 0
      %1073 = vmatprep.subr.bf16.mxu0 0
      %1074 = vmatpush1.bf16.msra.mxu0 0
      %1075 = vmatprep.subr.bf16.mxu0 0
      %1076 = vmatpush1.bf16.msra.mxu0 0
      %1077 = vmatprep.subr.bf16.mxu0 0
      %1078 = vmatpush1.bf16.msra.mxu0 0
      %1079 = vmatprep.subr.bf16.mxu0 0
      %1080 = vmatpush1.bf16.msra.mxu0 0
      %1081 = vmatprep.subr.bf16.mxu0 0
      %1082 = vmatpush1.bf16.msra.mxu0 0
      %1083 = vmatprep.subr.bf16.mxu0 0
      %1084 = vmatpush1.bf16.msra.mxu0 0
      %1085 = vmatprep.subr.bf16.mxu0 0
      %1086 = vmatpush1.bf16.msra.mxu0 0
      %1087 = vmatprep.subr.bf16.mxu0 0
      %1088 = vmatpush1.bf16.msra.mxu0 0
      %1089 = vmatprep.mubr.bf16.mxu0 0
      %1090 = vmatmul.mubr.bf16.gmra.mrb[0].mxu0 %v1007
      %v1091 = vpop.f32.mrb[0].mxu0
      %v1092 = vadd.f32 0.0, %v1091
      %v1093 = vpop.f32.mrb[0].mxu0
      %v1094 = vpop.f32.mrb[0].mxu0
      %v1095 = vadd.f32 0.0, %v1094
      %v1096 = vpop.f32.mrb[0].mxu0
      %1097 = vmatprep.mubr.bf16.mxu0 0
      %1098 = vmatmul.mubr.bf16.gmra.mrb[0].mxu0 %v1010
      %v1099 = vpop.f32.mrb[0].mxu0
      %v1100 = vadd.f32 0.0, %v1099
      %v1101 = vpop.f32.mrb[0].mxu0
      %v1102 = vpop.f32.mrb[0].mxu0
      %v1103 = vadd.f32 0.0, %v1102
      %v1104 = vpop.f32.mrb[0].mxu0
      %1105 = vmatprep.mubr.bf16.mxu0 0
      %1106 = vmatmul.mubr.bf16.gmra.mrb[0].mxu0 %v1013
      %v1107 = vpop.f32.mrb[0].mxu0
      %v1108 = vadd.f32 0.0, %v1107
      %v1109 = vpop.f32.mrb[0].mxu0
      %v1110 = vpop.f32.mrb[0].mxu0
      %v1111 = vadd.f32 0.0, %v1110
      %v1112 = vpop.f32.mrb[0].mxu0
      %1113 = vmatprep.mubr.bf16.mxu0 0
      %1114 = vmatmul.mubr.bf16.gmra.mrb[0].mxu0 %v1016
      %v1115 = vpop.f32.mrb[0].mxu0
      %v1116 = vadd.f32 0.0, %v1115
      %v1117 = vpop.f32.mrb[0].mxu0
      %v1118 = vpop.f32.mrb[0].mxu0
      %v1119 = vadd.f32 0.0, %v1118
      %v1120 = vpop.f32.mrb[0].mxu0
      %1121 = vmatprep.mubr.bf16.mxu0 0
      %1122 = vmatmul.mubr.bf16.gmra.mrb[0].mxu0 %v1019
      %v1123 = vpop.f32.mrb[0].mxu0
      %v1124 = vadd.f32 0.0, %v1123
      %v1125 = vpop.f32.mrb[0].mxu0
      %v1126 = vpop.f32.mrb[0].mxu0
      %v1127 = vadd.f32 0.0, %v1126
      %v1128 = vpop.f32.mrb[0].mxu0
      %1129 = vmatprep.mubr.bf16.mxu0 0
      %1130 = vmatmul.mubr.bf16.gmra.mrb[0].mxu0 %v1022
      %v1131 = vpop.f32.mrb[0].mxu0
      %v1132 = vadd.f32 0.0, %v1131
      %v1133 = vpop.f32.mrb[0].mxu0
      %v1134 = vpop.f32.mrb[0].mxu0
      %v1135 = vadd.f32 0.0, %v1134
      %v1136 = vpop.f32.mrb[0].mxu0
      %1137 = vmatprep.mubr.bf16.mxu0 0
      %1138 = vmatmul.mubr.bf16.gmra.mrb[0].mxu0 %v1025
      %v1139 = vpop.f32.mrb[0].mxu0
      %v1140 = vadd.f32 0.0, %v1139
      %v1141 = vpop.f32.mrb[0].mxu0
      %v1142 = vpop.f32.mrb[0].mxu0
      %v1143 = vadd.f32 0.0, %v1142
      %v1144 = vpop.f32.mrb[0].mxu0
      %1145 = vmatprep.mubr.bf16.mxu0 0
      %1146 = vmatmul.mubr.bf16.gmra.mrb[0].mxu0 %v1028
      %v1147 = vpop.f32.mrb[0].mxu0
      %v1148 = vadd.f32 0.0, %v1147
      %v1149 = vpop.f32.mrb[0].mxu0
      %v1150 = vpop.f32.mrb[0].mxu0
      %v1151 = vadd.f32 0.0, %v1150
      %v1152 = vpop.f32.mrb[0].mxu0
      %1153 = vmatprep.mubr.bf16.mxu0 0
      %1154 = vmatmul.mubr.bf16.gmra.mrb[0].mxu0 %v1031
      %v1155 = vpop.f32.mrb[0].mxu0
      %v1156 = vadd.f32 0.0, %v1155
      %v1157 = vpop.f32.mrb[0].mxu0
      %v1158 = vpop.f32.mrb[0].mxu0
      %v1159 = vadd.f32 0.0, %v1158
      %v1160 = vpop.f32.mrb[0].mxu0
      %1161 = vmatprep.mubr.bf16.mxu0 0
      %1162 = vmatmul.mubr.bf16.gmra.mrb[0].mxu0 %v1034
      %v1163 = vpop.f32.mrb[0].mxu0
      %v1164 = vadd.f32 0.0, %v1163
      %v1165 = vpop.f32.mrb[0].mxu0
      %v1166 = vpop.f32.mrb[0].mxu0
      %v1167 = vadd.f32 0.0, %v1166
      %v1168 = vpop.f32.mrb[0].mxu0
      %1169 = vmatprep.mubr.bf16.mxu0 0
      %1170 = vmatmul.mubr.bf16.gmra.mrb[0].mxu0 %v1037
      %v1171 = vpop.f32.mrb[0].mxu0
      %v1172 = vadd.f32 0.0, %v1171
      %v1173 = vpop.f32.mrb[0].mxu0
      %v1174 = vpop.f32.mrb[0].mxu0
      %v1175 = vadd.f32 0.0, %v1174
      %v1176 = vpop.f32.mrb[0].mxu0
      %1177 = vmatprep.mubr.bf16.mxu0 0
      %1178 = vmatmul.mubr.bf16.gmra.mrb[0].mxu0 %v1040
      %v1179 = vpop.f32.mrb[0].mxu0
      %v1180 = vadd.f32 0.0, %v1179
      %v1181 = vpop.f32.mrb[0].mxu0
      %v1182 = vpop.f32.mrb[0].mxu0
      %v1183 = vadd.f32 0.0, %v1182
      %v1184 = vpop.f32.mrb[0].mxu0
      %1185 = vmatprep.mubr.bf16.mxu0 0
      %1186 = vmatmul.mubr.bf16.gmra.mrb[0].mxu0 %v1043
      %v1187 = vpop.f32.mrb[0].mxu0
      %v1188 = vadd.f32 0.0, %v1187
      %v1189 = vpop.f32.mrb[0].mxu0
      %v1190 = vpop.f32.mrb[0].mxu0
      %v1191 = vadd.f32 0.0, %v1190
      %v1192 = vpop.f32.mrb[0].mxu0
      %1193 = vmatprep.mubr.bf16.mxu0 0
      %1194 = vmatmul.mubr.bf16.gmra.mrb[0].mxu0 %v1046
      %v1195 = vpop.f32.mrb[0].mxu0
      %v1196 = vadd.f32 0.0, %v1195
      %v1197 = vpop.f32.mrb[0].mxu0
      %v1198 = vpop.f32.mrb[0].mxu0
      %v1199 = vadd.f32 0.0, %v1198
      %v1200 = vpop.f32.mrb[0].mxu0
      %1201 = vmatprep.mubr.bf16.mxu0 0
      %1202 = vmatmul.mubr.bf16.gmra.mrb[0].mxu0 %v1049
      %v1203 = vpop.f32.mrb[0].mxu0
      %v1204 = vadd.f32 0.0, %v1203
      %v1205 = vpop.f32.mrb[0].mxu0
      %v1206 = vpop.f32.mrb[0].mxu0
      %v1207 = vadd.f32 0.0, %v1206
      %v1208 = vpop.f32.mrb[0].mxu0
      %1209 = vmatprep.mubr.bf16.mxu0 0
      %1210 = vmatmul.mubr.bf16.gmra.mrb[0].mxu0 %v1052
      %v1211 = vpop.f32.mrb[0].mxu0
      %v1212 = vadd.f32 0.0, %v1211
      %v1213 = vpop.f32.mrb[0].mxu0
      %v1214 = vpop.f32.mrb[0].mxu0
      %v1215 = vadd.f32 0.0, %v1214
      %v1216 = vpop.f32.mrb[0].mxu0
      %1217 = vdwg.mxu0
      %v1218 = vadd.f32 %v755, %v1092
      %v1219 = vadd.f32 %v758, %v1095
      %v1220 = vadd.f32 %v763, %v1100
      %v1221 = vadd.f32 %v766, %v1103
      %v1222 = vadd.f32 %v771, %v1108
      %v1223 = vadd.f32 %v774, %v1111
      %v1224 = vadd.f32 %v779, %v1116
      %v1225 = vadd.f32 %v782, %v1119
      %v1226 = vadd.f32 %v787, %v1124
      %v1227 = vadd.f32 %v790, %v1127
      %v1228 = vadd.f32 %v795, %v1132
      %v1229 = vadd.f32 %v798, %v1135
      %v1230 = vadd.f32 %v803, %v1140
      %v1231 = vadd.f32 %v806, %v1143
      %v1232 = vadd.f32 %v811, %v1148
      %v1233 = vadd.f32 %v814, %v1151
      %v1234 = vadd.f32 %v819, %v1156
      %v1235 = vadd.f32 %v822, %v1159
      %v1236 = vadd.f32 %v827, %v1164
      %v1237 = vadd.f32 %v830, %v1167
      %v1238 = vadd.f32 %v835, %v1172
      %v1239 = vadd.f32 %v838, %v1175
      %v1240 = vadd.f32 %v843, %v1180
      %v1241 = vadd.f32 %v846, %v1183
      %v1242 = vadd.f32 %v851, %v1188
      %v1243 = vadd.f32 %v854, %v1191
      %v1244 = vadd.f32 %v859, %v1196
      %v1245 = vadd.f32 %v862, %v1199
      %v1246 = vadd.f32 %v867, %v1204
      %v1247 = vadd.f32 %v870, %v1207
      %v1248 = vadd.f32 %v875, %v1212
      %v1249 = vadd.f32 %v878, %v1215
      %v1250 = vpack.c.bf16 %v1219, %v1218
      %v1251 = vpack.c.bf16 %v1221, %v1220
      %v1252 = vpack.c.bf16 %v1223, %v1222
      %v1253 = vpack.c.bf16 %v1225, %v1224
      %v1254 = vpack.c.bf16 %v1227, %v1226
      %v1255 = vpack.c.bf16 %v1229, %v1228
      %v1256 = vpack.c.bf16 %v1231, %v1230
      %v1257 = vpack.c.bf16 %v1233, %v1232
      %v1258 = vpack.c.bf16 %v1235, %v1234
      %v1259 = vpack.c.bf16 %v1237, %v1236
      %v1260 = vpack.c.bf16 %v1239, %v1238
      %v1261 = vpack.c.bf16 %v1241, %v1240
      %v1262 = vpack.c.bf16 %v1243, %v1242
      %v1263 = vpack.c.bf16 %v1245, %v1244
      %v1264 = vpack.c.bf16 %v1247, %v1246
      %v1265 = vpack.c.bf16 %v1249, %v1248
      %v1282 = vunpack.c.l.b16 %v1250
      %v1283 = vunpack.c.h.b16 %v1250
      %v1284 = vunpack.c.l.b16 %v1251
      %v1285 = vunpack.c.h.b16 %v1251
      %v1286 = vunpack.c.l.b16 %v1252
      %v1287 = vunpack.c.h.b16 %v1252
      %v1288 = vunpack.c.l.b16 %v1253
      %v1289 = vunpack.c.h.b16 %v1253
      %v1290 = vunpack.c.l.b16 %v1254
      %v1291 = vunpack.c.h.b16 %v1254
      %v1292 = vunpack.c.l.b16 %v1255
      %v1293 = vunpack.c.h.b16 %v1255
      %v1294 = vunpack.c.l.b16 %v1256
      %v1295 = vunpack.c.h.b16 %v1256
      %v1296 = vunpack.c.l.b16 %v1257
      %v1297 = vunpack.c.h.b16 %v1257
      %v1298 = vunpack.c.l.b16 %v1258
      %v1299 = vunpack.c.h.b16 %v1258
      %v1300 = vunpack.c.l.b16 %v1259
      %v1301 = vunpack.c.h.b16 %v1259
      %v1302 = vunpack.c.l.b16 %v1260
      %v1303 = vunpack.c.h.b16 %v1260
      %v1304 = vunpack.c.l.b16 %v1261
      %v1305 = vunpack.c.h.b16 %v1261
      %v1306 = vunpack.c.l.b16 %v1262
      %v1307 = vunpack.c.h.b16 %v1262
      %v1308 = vunpack.c.l.b16 %v1263
      %v1309 = vunpack.c.h.b16 %v1263
      %v1310 = vunpack.c.l.b16 %v1264
      %v1311 = vunpack.c.h.b16 %v1264
      %v1312 = vunpack.c.l.b16 %v1265
      %v1313 = vunpack.c.h.b16 %v1265
      %v1314 = vpack.c.b16 %v1282, %v1282
      %v1315 = vpack.c.b16 %v1283, %v1283
      %v1316 = vpack.c.b16 %v1284, %v1284
      %v1317 = vpack.c.b16 %v1285, %v1285
      %v1318 = vpack.c.b16 %v1286, %v1286
      %v1319 = vpack.c.b16 %v1287, %v1287
      %v1320 = vpack.c.b16 %v1288, %v1288
      %v1321 = vpack.c.b16 %v1289, %v1289
      %v1322 = vpack.c.b16 %v1290, %v1290
      %v1323 = vpack.c.b16 %v1291, %v1291
      %v1324 = vpack.c.b16 %v1292, %v1292
      %v1325 = vpack.c.b16 %v1293, %v1293
      %v1326 = vpack.c.b16 %v1294, %v1294
      %v1327 = vpack.c.b16 %v1295, %v1295
      %v1328 = vpack.c.b16 %v1296, %v1296
      %v1329 = vpack.c.b16 %v1297, %v1297
      %v1330 = vpack.c.b16 %v1298, %v1298
      %v1331 = vpack.c.b16 %v1299, %v1299
      %v1332 = vpack.c.b16 %v1300, %v1300
      %v1333 = vpack.c.b16 %v1301, %v1301
      %v1334 = vpack.c.b16 %v1302, %v1302
      %v1335 = vpack.c.b16 %v1303, %v1303
      %v1336 = vpack.c.b16 %v1304, %v1304
      %v1337 = vpack.c.b16 %v1305, %v1305
      %v1338 = vpack.c.b16 %v1306, %v1306
      %v1339 = vpack.c.b16 %v1307, %v1307
      %v1340 = vpack.c.b16 %v1308, %v1308
      %v1341 = vpack.c.b16 %v1309, %v1309
      %v1342 = vpack.c.b16 %v1310, %v1310
      %v1343 = vpack.c.b16 %v1311, %v1311
      %v1344 = vpack.c.b16 %v1312, %v1312
      %v1345 = vpack.c.b16 %v1313, %v1313
      %1378 = vst [vmem:[%s196] sm:$0xf] %v1314
      %1379 = vst [vmem:[%s196 + $0x4] sm:$0xf] %v1315
      %1380 = vst [vmem:[%s196 + $0x8] sm:$0xf] %v1316
      %1381 = vst [vmem:[%s196 + $0xc] sm:$0xf] %v1317
      %1382 = vst [vmem:[%s196 + $0x10] sm:$0xf] %v1318
      %1383 = vst [vmem:[%s196 + $0x14] sm:$0xf] %v1319
      %1384 = vst [vmem:[%s196 + $0x18] sm:$0xf] %v1320
      %1385 = vst [vmem:[%s196 + $0x1c] sm:$0xf] %v1321
      %1386 = vst [vmem:[%s196 + $0x20] sm:$0xf] %v1322
      %1387 = vst [vmem:[%s196 + $0x24] sm:$0xf] %v1323
      %1388 = vst [vmem:[%s196 + $0x28] sm:$0xf] %v1324
      %1389 = vst [vmem:[%s196 + $0x2c] sm:$0xf] %v1325
      %1390 = vst [vmem:[%s196 + $0x30] sm:$0xf] %v1326
      %1391 = vst [vmem:[%s196 + $0x34] sm:$0xf] %v1327
      %1392 = vst [vmem:[%s196 + $0x38] sm:$0xf] %v1328
      %1393 = vst [vmem:[%s196 + $0x3c] sm:$0xf] %v1329
      %1394 = vst [vmem:[%s196 + $0x40] sm:$0xf] %v1330
      %1395 = vst [vmem:[%s196 + $0x44] sm:$0xf] %v1331
      %1396 = vst [vmem:[%s196 + $0x48] sm:$0xf] %v1332
      %1397 = vst [vmem:[%s196 + $0x4c] sm:$0xf] %v1333
      %1398 = vst [vmem:[%s196 + $0x50] sm:$0xf] %v1334
      %1399 = vst [vmem:[%s196 + $0x54] sm:$0xf] %v1335
      %1400 = vst [vmem:[%s196 + $0x58] sm:$0xf] %v1336
      %1401 = vst [vmem:[%s196 + $0x5c] sm:$0xf] %v1337
      %1402 = vst [vmem:[%s196 + $0x60] sm:$0xf] %v1338
      %1403 = vst [vmem:[%s196 + $0x64] sm:$0xf] %v1339
      %1404 = vst [vmem:[%s196 + $0x68] sm:$0xf] %v1340
      %1405 = vst [vmem:[%s196 + $0x6c] sm:$0xf] %v1341
      %1406 = vst [vmem:[%s196 + $0x70] sm:$0xf] %v1342
      %1407 = vst [vmem:[%s196 + $0x74] sm:$0xf] %v1343
      %1408 = vst [vmem:[%s196 + $0x78] sm:$0xf] %v1344
      %1409 = vst [vmem:[%s196 + $0x7c] sm:$0xf] %v1345
      %v1410 = vadd.f32 %v1218, %v1219
      %v1411 = vadd.f32 %v1410, %v1220
      %v1412 = vadd.f32 %v1411, %v1221
      %v1413 = vadd.f32 %v1412, %v1222
      %v1414 = vadd.f32 %v1413, %v1223
      %v1415 = vadd.f32 %v1414, %v1224
      %v1416 = vadd.f32 %v1415, %v1225
      %v1417 = vadd.f32 %v1416, %v1226
      %v1418 = vadd.f32 %v1417, %v1227
      %v1419 = vadd.f32 %v1418, %v1228
      %v1420 = vadd.f32 %v1419, %v1229
      %v1421 = vadd.f32 %v1420, %v1230
      %v1422 = vadd.f32 %v1421, %v1231
      %v1423 = vadd.f32 %v1422, %v1232
      %v1424 = vadd.f32 %v1423, %v1233
      %v1425 = vadd.f32 %v1424, %v1234
      %v1426 = vadd.f32 %v1425, %v1235
      %v1427 = vadd.f32 %v1426, %v1236
      %v1428 = vadd.f32 %v1427, %v1237
      %v1429 = vadd.f32 %v1428, %v1238
      %v1430 = vadd.f32 %v1429, %v1239
      %v1431 = vadd.f32 %v1430, %v1240
      %v1432 = vadd.f32 %v1431, %v1241
      %v1433 = vadd.f32 %v1432, %v1242
      %v1434 = vadd.f32 %v1433, %v1243
      %v1435 = vadd.f32 %v1434, %v1244
      %v1436 = vadd.f32 %v1435, %v1245
      %v1437 = vadd.f32 %v1436, %v1246
      %v1438 = vadd.f32 %v1437, %v1247
      %v1439 = vadd.f32 %v1438, %v1248
      %v1440 = vadd.f32 %v1439, %v1249
      %v1441 = vrot.slane %v1440, 4
      %v1442 = vadd.f32 %v1440, %v1441
      %v1443 = vrot.slane %v1442, 2
      %v1444 = vadd.f32 %v1442, %v1443
      %v1445 = vrot.slane %v1444, 1
      %v1446 = vadd.f32 %v1444, %v1445
      %v1447 = vmul.f32 %v1446, 0.00390625
      %v1448 = vsub.f32 %v1218, %v1447
      %v1449 = vsub.f32 %v1219, %v1447
      %v1450 = vsub.f32 %v1220, %v1447
      %v1451 = vsub.f32 %v1221, %v1447
      %v1452 = vsub.f32 %v1222, %v1447
      %v1453 = vsub.f32 %v1223, %v1447
      %v1454 = vsub.f32 %v1224, %v1447
      %v1455 = vsub.f32 %v1225, %v1447
      %v1456 = vsub.f32 %v1226, %v1447
      %v1457 = vsub.f32 %v1227, %v1447
      %v1458 = vsub.f32 %v1228, %v1447
      %v1459 = vsub.f32 %v1229, %v1447
      %v1460 = vsub.f32 %v1230, %v1447
      %v1461 = vsub.f32 %v1231, %v1447
      %v1462 = vsub.f32 %v1232, %v1447
      %v1463 = vsub.f32 %v1233, %v1447
      %v1464 = vsub.f32 %v1234, %v1447
      %v1465 = vsub.f32 %v1235, %v1447
      %v1466 = vsub.f32 %v1236, %v1447
      %v1467 = vsub.f32 %v1237, %v1447
      %v1468 = vsub.f32 %v1238, %v1447
      %v1469 = vsub.f32 %v1239, %v1447
      %v1470 = vsub.f32 %v1240, %v1447
      %v1471 = vsub.f32 %v1241, %v1447
      %v1472 = vsub.f32 %v1242, %v1447
      %v1473 = vsub.f32 %v1243, %v1447
      %v1474 = vsub.f32 %v1244, %v1447
      %v1475 = vsub.f32 %v1245, %v1447
      %v1476 = vsub.f32 %v1246, %v1447
      %v1477 = vsub.f32 %v1247, %v1447
      %v1478 = vsub.f32 %v1248, %v1447
      %v1479 = vsub.f32 %v1249, %v1447
      %1480 = vst [vmem:[%s203] sm:$0x1] %v1446
      %v1481 = vmul.f32 %v1448, %v1448
      %v1482 = vmul.f32 %v1449, %v1449
      %v1483 = vmul.f32 %v1450, %v1450
      %v1484 = vmul.f32 %v1451, %v1451
      %v1485 = vmul.f32 %v1452, %v1452
      %v1486 = vmul.f32 %v1453, %v1453
      %v1487 = vmul.f32 %v1454, %v1454
      %v1488 = vmul.f32 %v1455, %v1455
      %v1489 = vmul.f32 %v1456, %v1456
      %v1490 = vmul.f32 %v1457, %v1457
      %v1491 = vmul.f32 %v1458, %v1458
      %v1492 = vmul.f32 %v1459, %v1459
      %v1493 = vmul.f32 %v1460, %v1460
      %v1494 = vmul.f32 %v1461, %v1461
      %v1495 = vmul.f32 %v1462, %v1462
      %v1496 = vmul.f32 %v1463, %v1463
      %v1497 = vmul.f32 %v1464, %v1464
      %v1498 = vmul.f32 %v1465, %v1465
      %v1499 = vmul.f32 %v1466, %v1466
      %v1500 = vmul.f32 %v1467, %v1467
      %v1501 = vmul.f32 %v1468, %v1468
      %v1502 = vmul.f32 %v1469, %v1469
      %v1503 = vmul.f32 %v1470, %v1470
      %v1504 = vmul.f32 %v1471, %v1471
      %v1505 = vmul.f32 %v1472, %v1472
      %v1506 = vmul.f32 %v1473, %v1473
      %v1507 = vmul.f32 %v1474, %v1474
      %v1508 = vmul.f32 %v1475, %v1475
      %v1509 = vmul.f32 %v1476, %v1476
      %v1510 = vmul.f32 %v1477, %v1477
      %v1511 = vmul.f32 %v1478, %v1478
      %v1512 = vmul.f32 %v1479, %v1479
      %v1513 = vadd.f32 %v1481, %v1482
      %v1514 = vadd.f32 %v1513, %v1483
      %v1515 = vadd.f32 %v1514, %v1484
      %v1516 = vadd.f32 %v1515, %v1485
      %v1517 = vadd.f32 %v1516, %v1486
      %v1518 = vadd.f32 %v1517, %v1487
      %v1519 = vadd.f32 %v1518, %v1488
      %v1520 = vadd.f32 %v1519, %v1489
      %v1521 = vadd.f32 %v1520, %v1490
      %v1522 = vadd.f32 %v1521, %v1491
      %v1523 = vadd.f32 %v1522, %v1492
      %v1524 = vadd.f32 %v1523, %v1493
      %v1525 = vadd.f32 %v1524, %v1494
      %v1526 = vadd.f32 %v1525, %v1495
      %v1527 = vadd.f32 %v1526, %v1496
      %v1528 = vadd.f32 %v1527, %v1497
      %v1529 = vadd.f32 %v1528, %v1498
      %v1530 = vadd.f32 %v1529, %v1499
      %v1531 = vadd.f32 %v1530, %v1500
      %v1532 = vadd.f32 %v1531, %v1501
      %v1533 = vadd.f32 %v1532, %v1502
      %v1534 = vadd.f32 %v1533, %v1503
      %v1535 = vadd.f32 %v1534, %v1504
      %v1536 = vadd.f32 %v1535, %v1505
      %v1537 = vadd.f32 %v1536, %v1506
      %v1538 = vadd.f32 %v1537, %v1507
      %v1539 = vadd.f32 %v1538, %v1508
      %v1540 = vadd.f32 %v1539, %v1509
      %v1541 = vadd.f32 %v1540, %v1510
      %v1542 = vadd.f32 %v1541, %v1511
      %v1543 = vadd.f32 %v1542, %v1512
      %v1544 = vrot.slane %v1543, 4
      %v1545 = vadd.f32 %v1543, %v1544
      %v1546 = vrot.slane %v1545, 2
      %v1547 = vadd.f32 %v1545, %v1546
      %v1548 = vrot.slane %v1547, 1
      %v1549 = vadd.f32 %v1547, %v1548
      %1550 = vst [vmem:[%s203 + $0x1] sm:$0x1] %v1549
      %s1551 = sadd.s32 %s19, %s20
      %s1552 = smul.u32 32, %s1551
      %p1553 = scmp.lt.s32.totalorder %s1552, 63
      %s1554 = scalar_select %p1553, %s1552, 63
      %s1555 = smul.addr %s1554, 4
      %s1556 = scalar_lea.vmem %s2, %s1555
      %s1557 = sadd.s32 %s19, %s20
      %p1558 = scmp.lt.s32.totalorder %s1557, 1
      %s1559 = scalar_select %p1558, %s1557, 1
      %s1560 = smul.addr %s1559, 2
      %s1561 = scalar_lea.vmem %s3, %s1560
      // Predicated region
      $region29: #{downblock2d_forward.2} parent=27 // pred_check
        %p1562 = pneg %p94
      $region30: #{downblock2d_forward.2} parent=27 // pred_check_branch
        %1564 = sbr.rel (%p1562) target = $region32
      $region31: #{downblock2d_forward.2} parent=27 // pred_region
        %s1565 = sadd.s32 %s19, %s20
        %s1566 = smul.u32 32, %s1565
      $region32: #{downblock2d_forward.2} parent=27 // pred_fallthru
        _
      // Predicated region
      $region33: #{downblock2d_forward.2} parent=27 // pred_check
        %p1567 = pneg %p122
      $region34: #{downblock2d_forward.2} parent=27 // pred_check_branch
        %1569 = sbr.rel (%p1567) target = $region36
      $region35: #{downblock2d_forward.2} parent=27 // pred_region
        %s1570 = sadd.s32 %s19, %s20
      $region36: #{downblock2d_forward.2} parent=27 // pred_fallthru
        _
    $region28: #{downblock2d_forward.2} parent=5 // pred_fallthru
      _
    %p1571 = scmp.le.s32.totalorder 2, %s10
    // Predicated region
    $region37: #{downblock2d_forward.2} parent=5 // pred_check
      %p1572 = pneg %p1571
    $region38: #{downblock2d_forward.2} parent=5 // pred_check_branch
      %1574 = sbr.rel (%p1572) target = $region40
    $region39: #{downblock2d_forward.2} parent=5 // pred_region
      %s1575 = ssub.s32 %s10, 2
      // Predicated region
      $region41: #{downblock2d_forward.2} parent=39 // pred_check
        %p1576 = pneg %p100
      $region42: #{downblock2d_forward.2} parent=39 // pred_check_branch
        %1578 = sbr.rel (%p1576) target = $region44
      $region43: #{downblock2d_forward.2} parent=39 // pred_region
        %s1579 = sadd.s32 %s21, %s22
        %s1580 = smul.u32 32, %s1579
        %p1581 = scmp.lt.s32.totalorder %s1580, 63
        %s1582 = scalar_select %p1581, %s1580, 63
        %s1583 = smul.addr %s1582, 4
        %s1584 = scalar_lea.vmem %s2, %s1583
      $region44: #{downblock2d_forward.2} parent=39 // pred_fallthru
        _
      // Predicated region
      $region45: #{downblock2d_forward.2} parent=39 // pred_check
        %p1585 = pneg %p128
      $region46: #{downblock2d_forward.2} parent=39 // pred_check_branch
        %1587 = sbr.rel (%p1585) target = $region48
      $region47: #{downblock2d_forward.2} parent=39 // pred_region
        %s1588 = sadd.s32 %s21, %s22
        %p1589 = scmp.lt.s32.totalorder %s1588, 1
        %s1590 = scalar_select %p1589, %s1588, 1
        %s1591 = smul.addr %s1590, 2
        %s1592 = scalar_lea.vmem %s3, %s1591
      $region48: #{downblock2d_forward.2} parent=39 // pred_fallthru
        _
    $region40: #{downblock2d_forward.2} parent=5 // pred_fallthru
      _
  $region6: #{downblock2d_forward.2} parent=0 // loop_footer
    %s14 = sadd.s32 1, %s10
  $region7: #{downblock2d_forward.2} parent=0 // loop_footer_branch
    %9 = sbr.rel target = $region3
  $region8: #{downblock2d_forward.2} parent=0 // loop_exit
    _

</llo_original>
